<compile_context>
chip_gen: v7x
topology: tpu7x:2x2x1
jax: 0.10.0
libtpu: 0.0.40
codegen_flags: <defaults>
</compile_context>

<pallas_src>
import functools

import jax
import jax.numpy as jnp
from jax.experimental import pallas as pl
from jax.experimental.pallas import tpu as pltpu


# ----------------------------------------------------------------------------
# Fused forward kernel
# ----------------------------------------------------------------------------

def _fused_forward_kernel(
    h_ref, eps_ref,
    enc_w1_ref, enc_b1_ref, enc_wtr_ref, enc_btr_ref, enc_wre_ref, enc_bre_ref,
    cb_tr_ref, cb_tr_sq_ref, cb_re_ref, cb_re_sq_ref,
    wm1_h_ref, wm1_c_ref, bm1_ref, wm2_ref, bm2_ref,
    wl1_h_ref, wl1_c_ref, bl1_ref, wl2_ref, bl2_ref,
    out_ref, *, out_pad):
    """Full CausalModel inference forward on whole-array VMEM blocks.

    Output slab layout (lane axis): [q_tr | q_re | hard_tr | hard_re | u_post | 0-pad]
    """
    f32 = jnp.float32

    def dot(a, b):
        return jnp.dot(a, b, preferred_element_type=f32)

    # ---- CausalEncoder: shared trunk -> tr / re projection heads ----------
    h = h_ref[...]
    trunk = jnp.maximum(dot(h, enc_w1_ref[...]) + enc_b1_ref[...], 0.0)
    h_tr = dot(trunk, enc_wtr_ref[...]) + enc_btr_ref[...]
    h_re = dot(trunk, enc_wre_ref[...]) + enc_bre_ref[...]

    # ---- DualVQQuantizer (inference): euclidean nearest code --------------
    def nearest_code(z, e_ref, e_sq_ref):
        e = e_ref[...]                                           # [K, D]
        k = e.shape[0]
        z2 = jnp.sum(z * z, axis=-1, keepdims=True)              # [B, 1]
        ze = dot(z, e.T)                                         # [B, K]
        dist = z2 - 2.0 * ze + e_sq_ref[...]                     # [B, K]
        # First-index-of-min one-hot (matches torch argmin tie-break) without
        # relying on an argmin lowering: min -> mask -> min of masked iota.
        dmin = jnp.min(dist, axis=-1, keepdims=True)             # [B, 1]
        lane = jax.lax.broadcasted_iota(jnp.int32, dist.shape, 1)
        idx = jnp.min(jnp.where(dist <= dmin, lane, k),
                      axis=-1, keepdims=True)                    # [B, 1]
        hard = (lane == idx).astype(f32)                         # [B, K] one-hot
        quant = dot(hard, e)                                     # gather-as-matmul
        return quant, hard

    q_tr, hard_tr = nearest_code(h_tr, cb_tr_ref, cb_tr_sq_ref)
    q_re, hard_re = nearest_code(h_re, cb_re_ref, cb_re_sq_ref)

    # ---- _inference_posterior: mu/logvar MLPs + clamp + reparameterize ----
    # Split-weight first layers: dot(h, W[:Dc]) + dot(code, W[Dc:]) is the
    # exact equivalent of dot(concat(h, code), W) without a lane-axis concat.
    hm = jnp.maximum(
        dot(h_tr, wm1_h_ref[...]) + dot(q_tr, wm1_c_ref[...]) + bm1_ref[...], 0.0)
    mu_post = jnp.clip(dot(hm, wm2_ref[...]) + bm2_ref[...], -10.0, 10.0)

    hl = jnp.maximum(
        dot(h_tr, wl1_h_ref[...]) + dot(q_tr, wl1_c_ref[...]) + bl1_ref[...], 0.0)
    logvar_post = dot(hl, wl2_ref[...]) + bl2_ref[...]

    u_post = mu_post + jnp.exp(0.5 * logvar_post) * eps_ref[...]

    # ---- Pack everything into one lane-dense slab and store once ----------
    pieces = [q_tr, q_re, hard_tr, hard_re, u_post]
    if out_pad > 0:
        pieces.append(jnp.zeros((q_tr.shape[0], out_pad), f32))
    out_ref[...] = jnp.concatenate(pieces, axis=-1)


# ----------------------------------------------------------------------------
# Parameters (deterministic synthetic weights)
# ----------------------------------------------------------------------------

def init_params(key, d_model, enc_hidden, code_dim_tr, code_dim_re,
                num_codes_tr, num_codes_re, conf_dim, post_hidden):
    ks = jax.random.split(key, 16)
    n = lambda k, shape: (0.02 * jax.random.normal(k, shape)).astype(jnp.float32)
    z = lambda shape: jnp.zeros(shape, jnp.float32)
    return {
        # encoder: shared trunk -> tr / re projection heads
        "enc_w1": n(ks[0], (d_model, enc_hidden)), "enc_b1": z((enc_hidden,)),
        "enc_wtr": n(ks[1], (enc_hidden, code_dim_tr)), "enc_btr": z((code_dim_tr,)),
        "enc_wre": n(ks[2], (enc_hidden, code_dim_re)), "enc_bre": z((code_dim_re,)),
        # dual VQ codebooks
        "codebook_tr": n(ks[3], (num_codes_tr, code_dim_tr)),
        "codebook_re": n(ks[4], (num_codes_re, code_dim_re)),
        # confounder prior tables exist in the module, but on the inference
        # path their outputs are never consumed, so the forward below never
        # touches them (pure dead work, intentionally skipped).
        "prior_mu_table": n(ks[5], (num_codes_tr, conf_dim)),
        "prior_logvar_table": n(ks[6], (num_codes_tr, conf_dim)),
        # confounder posterior (mu net and logvar net on concat(h_proj, code_emb))
        "post": {
            "wm1": n(ks[7], (2 * code_dim_tr, post_hidden)), "bm1": z((post_hidden,)),
            "wm2": n(ks[8], (post_hidden, conf_dim)), "bm2": z((conf_dim,)),
            "wl1": n(ks[9], (2 * code_dim_tr, post_hidden)), "bl1": z((post_hidden,)),
            "wl2": n(ks[10], (post_hidden, conf_dim)), "bl2": z((conf_dim,)),
        },
    }


# ----------------------------------------------------------------------------
# Model wrapper (inference forward: training=False branch of CausalModel)
# ----------------------------------------------------------------------------

def causal_model_forward(params, h, eps):
    """Inference forward (training=False). Returns (quant_output_dict, u_post, None)."""
    B, d_model = h.shape
    Ktr, Dtr = params["codebook_tr"].shape
    Kre, Dre = params["codebook_re"].shape
    H_enc = params["enc_w1"].shape[1]
    post = params["post"]
    Hp = post["wm1"].shape[1]
    C = post["wm2"].shape[1]

    raw_w = Dtr + Dre + Ktr + Kre + C
    out_w = max(128, ((raw_w + 127) // 128) * 128)   # lane-dense output slab
    out_pad = out_w - raw_w

    # Precompute per-code squared norms outside the kernel (constant per call).
    cb_tr_sq = jnp.sum(params["codebook_tr"] ** 2, axis=-1)[None, :]   # [1, Ktr]
    cb_re_sq = jnp.sum(params["codebook_re"] ** 2, axis=-1)[None, :]   # [1, Kre]

    # Split the posterior first-layer weights so the kernel never concats
    # along the lane axis before a matmul.
    wm1_h, wm1_c = post["wm1"][:Dtr], post["wm1"][Dtr:]
    wl1_h, wl1_c = post["wl1"][:Dtr], post["wl1"][Dtr:]

    row = lambda b: b.reshape(1, -1)

    inputs = (
        h, eps,
        params["enc_w1"], row(params["enc_b1"]),
        params["enc_wtr"], row(params["enc_btr"]),
        params["enc_wre"], row(params["enc_bre"]),
        params["codebook_tr"], cb_tr_sq,
        params["codebook_re"], cb_re_sq,
        wm1_h, wm1_c, row(post["bm1"]), post["wm2"], row(post["bm2"]),
        wl1_h, wl1_c, row(post["bl1"]), post["wl2"], row(post["bl2"]),
    )

    vmem_spec = pl.BlockSpec(memory_space=pltpu.MemorySpace.VMEM)

    flops = 2 * B * (
        d_model * H_enc + H_enc * (Dtr + Dre)          # encoder
        + Dtr * Ktr + Ktr * Dtr                        # VQ tr: dist + gather
        + Dre * Kre + Kre * Dre                        # VQ re: dist + gather
        + 2 * (2 * Dtr * Hp + Hp * C)                  # posterior mu + logvar nets
    )
    bytes_accessed = sum(int(x.size) * 4 for x in inputs) + B * out_w * 4

    slab = pl.pallas_call(
        functools.partial(_fused_forward_kernel, out_pad=out_pad),
        out_shape=jax.ShapeDtypeStruct((B, out_w), jnp.float32),
        in_specs=[vmem_spec] * len(inputs),
        out_specs=vmem_spec,
        cost_estimate=pl.CostEstimate(
            flops=flops, transcendentals=B * C, bytes_accessed=bytes_accessed),
    )(*inputs)

    # Unpack the lane-dense slab (cheap XLA slices on a single HBM buffer).
    o = 0
    quantized_tr = slab[:, o:o + Dtr]; o += Dtr
    quantized_re = slab[:, o:o + Dre]; o += Dre
    hard_tr = slab[:, o:o + Ktr]; o += Ktr
    hard_re = slab[:, o:o + Kre]; o += Kre
    u_post = slab[:, o:o + C]

    # Indices recovered from the exact one-hots (same tie-break: first max).
    indices_tr = jnp.argmax(hard_tr, axis=-1).astype(jnp.int32)[:, None]
    indices_re = jnp.argmax(hard_re, axis=-1).astype(jnp.int32)[:, None]

    quant_output_dict = {
        "quantized_tr": quantized_tr, "quantized_re": quantized_re,
        "hard_tr": hard_tr, "hard_re": hard_re,
        "indices_tr": indices_tr, "indices_re": indices_re,
    }
    # mu_prior / logvar_prior are computed-then-ignored in the torch inference
    # path; they are intentionally not computed here (pure dead work).
    return quant_output_dict, u_post, None


# ----------------------------------------------------------------------------
# Main
# ----------------------------------------------------------------------------

if __name__ == "__main__":
    # Small shapes consistent with the module's __init__
    B = 8             # batch
    d_model = 32      # hidden_state_dim
    enc_hidden = 32   # Encoder.HiddenDim
    code_dim_tr = 16  # TrCodeDim (== Encoder.TransProjDim)
    code_dim_re = 16  # ReCodeDim (== Encoder.RewProjDim)
    num_codes_tr = 32
    num_codes_re = 32
    conf_dim = 16     # Confounder.ConfDim
    post_hidden = 32  # Confounder.HiddenDim

    key = jax.random.PRNGKey(0)
    k_par, k_h, k_eps = jax.random.split(key, 3)

    params = init_params(k_par, d_model, enc_hidden, code_dim_tr, code_dim_re,
                         num_codes_tr, num_codes_re, conf_dim, post_hidden)

    h = jax.random.normal(k_h, (B, d_model), dtype=jnp.float32)
    eps = jax.random.normal(k_eps, (B, conf_dim), dtype=jnp.float32)

    quant_output_dict, u_post, _ = jax.jit(causal_model_forward)(params, h, eps)
    jax.block_until_ready(u_post)
    jax.block_until_ready(quant_output_dict["quantized_tr"])

    # basic sanity checks on shapes/dtypes/consistency
    assert u_post.shape == (B, conf_dim)
    assert quant_output_dict["quantized_tr"].shape == (B, code_dim_tr)
    assert quant_output_dict["quantized_re"].shape == (B, code_dim_re)
    assert quant_output_dict["hard_tr"].shape == (B, num_codes_tr)
    assert quant_output_dict["hard_re"].shape == (B, num_codes_re)
    assert quant_output_dict["indices_tr"].shape == (B, 1)
    assert quant_output_dict["indices_tr"].dtype == jnp.int32
    # one-hot rows sum to 1 and quantized == codebook[index]
    assert jnp.allclose(quant_output_dict["hard_tr"].sum(-1), 1.0)
    gathered = params["codebook_tr"][quant_output_dict["indices_tr"][:, 0]]
    assert jnp.allclose(quant_output_dict["quantized_tr"], gathered, atol=1e-6)

    # cross-check nearest-code selection against a pure-JAX reference
    trunk = jnp.maximum(h @ params["enc_w1"] + params["enc_b1"], 0.0)
    h_tr_ref = trunk @ params["enc_wtr"] + params["enc_btr"]
    dist_ref = jnp.sum((h_tr_ref[:, None, :] - params["codebook_tr"][None]) ** 2, -1)
    assert jnp.array_equal(jnp.argmin(dist_ref, -1).astype(jnp.int32),
                           quant_output_dict["indices_tr"][:, 0])

    print("KERNEL_OK")
</pallas_src>

<mosaic_0001>
module attributes {stable_mosaic.version = 11 : i64} {
  func.func @_fused_forward_kernel(%arg0: memref<8x32xf32, #tpu.memory_space<vmem>>, %arg1: memref<8x16xf32, #tpu.memory_space<vmem>>, %arg2: memref<32x32xf32, #tpu.memory_space<vmem>>, %arg3: memref<1x32xf32, #tpu.memory_space<vmem>>, %arg4: memref<32x16xf32, #tpu.memory_space<vmem>>, %arg5: memref<1x16xf32, #tpu.memory_space<vmem>>, %arg6: memref<32x16xf32, #tpu.memory_space<vmem>>, %arg7: memref<1x16xf32, #tpu.memory_space<vmem>>, %arg8: memref<32x16xf32, #tpu.memory_space<vmem>>, %arg9: memref<1x32xf32, #tpu.memory_space<vmem>>, %arg10: memref<32x16xf32, #tpu.memory_space<vmem>>, %arg11: memref<1x32xf32, #tpu.memory_space<vmem>>, %arg12: memref<16x32xf32, #tpu.memory_space<vmem>>, %arg13: memref<16x32xf32, #tpu.memory_space<vmem>>, %arg14: memref<1x32xf32, #tpu.memory_space<vmem>>, %arg15: memref<32x16xf32, #tpu.memory_space<vmem>>, %arg16: memref<1x16xf32, #tpu.memory_space<vmem>>, %arg17: memref<16x32xf32, #tpu.memory_space<vmem>>, %arg18: memref<16x32xf32, #tpu.memory_space<vmem>>, %arg19: memref<1x32xf32, #tpu.memory_space<vmem>>, %arg20: memref<32x16xf32, #tpu.memory_space<vmem>>, %arg21: memref<1x16xf32, #tpu.memory_space<vmem>>, %arg22: memref<8x128xf32, #tpu.memory_space<vmem>>) attributes {dimension_semantics = [], scalar_prefetch = 0 : i64, scratch_operands = 0 : i64, tpu.core_type = #tpu.core_type<tc>} {
    %c0 = arith.constant 0 : index
    %c0_0 = arith.constant 0 : index
    %0 = vector.load %arg0[%c0, %c0_0] : memref<8x32xf32, #tpu.memory_space<vmem>>, vector<8x32xf32>
    %c0_1 = arith.constant 0 : index
    %c0_2 = arith.constant 0 : index
    %1 = vector.load %arg2[%c0_1, %c0_2] : memref<32x32xf32, #tpu.memory_space<vmem>>, vector<32x32xf32>
    %cst = arith.constant dense<0.000000e+00> : vector<8x32xf32>
    %2 = tpu.matmul %0, %1, %cst {dimension_numbers = #tpu.dot_dimension_numbers<[1], [0], [0], [1], [0, 0, 1, 1], [], []>} : vector<8x32xf32>, vector<32x32xf32>, vector<8x32xf32> -> vector<8x32xf32>
    %c0_3 = arith.constant 0 : index
    %c0_4 = arith.constant 0 : index
    %3 = vector.load %arg3[%c0_3, %c0_4] : memref<1x32xf32, #tpu.memory_space<vmem>>, vector<1x32xf32>
    %4 = vector.broadcast %3 : vector<1x32xf32> to vector<8x32xf32>
    %5 = arith.addf %2, %4 : vector<8x32xf32>
    %cst_5 = arith.constant 0.000000e+00 : f32
    %6 = vector.broadcast %cst_5 : f32 to vector<8x32xf32>
    %7 = arith.maximumf %5, %6 : vector<8x32xf32>
    %c0_6 = arith.constant 0 : index
    %c0_7 = arith.constant 0 : index
    %8 = vector.load %arg4[%c0_6, %c0_7] : memref<32x16xf32, #tpu.memory_space<vmem>>, vector<32x16xf32>
    %cst_8 = arith.constant dense<0.000000e+00> : vector<8x16xf32>
    %9 = tpu.matmul %7, %8, %cst_8 {dimension_numbers = #tpu.dot_dimension_numbers<[1], [0], [0], [1], [0, 0, 1, 1], [], []>} : vector<8x32xf32>, vector<32x16xf32>, vector<8x16xf32> -> vector<8x16xf32>
    %c0_9 = arith.constant 0 : index
    %c0_10 = arith.constant 0 : index
    %10 = vector.load %arg5[%c0_9, %c0_10] : memref<1x16xf32, #tpu.memory_space<vmem>>, vector<1x16xf32>
    %11 = vector.broadcast %10 : vector<1x16xf32> to vector<8x16xf32>
    %12 = arith.addf %9, %11 : vector<8x16xf32>
    %c0_11 = arith.constant 0 : index
    %c0_12 = arith.constant 0 : index
    %13 = vector.load %arg6[%c0_11, %c0_12] : memref<32x16xf32, #tpu.memory_space<vmem>>, vector<32x16xf32>
    %cst_13 = arith.constant dense<0.000000e+00> : vector<8x16xf32>
    %14 = tpu.matmul %7, %13, %cst_13 {dimension_numbers = #tpu.dot_dimension_numbers<[1], [0], [0], [1], [0, 0, 1, 1], [], []>} : vector<8x32xf32>, vector<32x16xf32>, vector<8x16xf32> -> vector<8x16xf32>
    %c0_14 = arith.constant 0 : index
    %c0_15 = arith.constant 0 : index
    %15 = vector.load %arg7[%c0_14, %c0_15] : memref<1x16xf32, #tpu.memory_space<vmem>>, vector<1x16xf32>
    %16 = vector.broadcast %15 : vector<1x16xf32> to vector<8x16xf32>
    %17 = arith.addf %14, %16 : vector<8x16xf32>
    %c0_16 = arith.constant 0 : index
    %c0_17 = arith.constant 0 : index
    %18 = vector.load %arg8[%c0_16, %c0_17] : memref<32x16xf32, #tpu.memory_space<vmem>>, vector<32x16xf32>
    %19 = arith.mulf %12, %12 : vector<8x16xf32>
    %cst_18 = arith.constant dense<0.000000e+00> : vector<8xf32>
    %20 = vector.multi_reduction <add>, %19, %cst_18 [1] : vector<8x16xf32> to vector<8xf32>
    %21 = vector.shape_cast %20 : vector<8xf32> to vector<8x1xf32>
    %22 = tpu.transpose %18, [1, 0] : vector<32x16xf32> -> vector<16x32xf32>
    %cst_19 = arith.constant dense<0.000000e+00> : vector<8x32xf32>
    %23 = tpu.matmul %12, %22, %cst_19 {dimension_numbers = #tpu.dot_dimension_numbers<[1], [0], [0], [1], [0, 0, 1, 1], [], []>} : vector<8x16xf32>, vector<16x32xf32>, vector<8x32xf32> -> vector<8x32xf32>
    %cst_20 = arith.constant 2.000000e+00 : f32
    %24 = vector.broadcast %cst_20 : f32 to vector<8x32xf32>
    %25 = arith.mulf %24, %23 : vector<8x32xf32>
    %26 = vector.broadcast %21 : vector<8x1xf32> to vector<8x32xf32>
    %27 = arith.subf %26, %25 : vector<8x32xf32>
    %c0_21 = arith.constant 0 : index
    %c0_22 = arith.constant 0 : index
    %28 = vector.load %arg9[%c0_21, %c0_22] : memref<1x32xf32, #tpu.memory_space<vmem>>, vector<1x32xf32>
    %29 = vector.broadcast %28 : vector<1x32xf32> to vector<8x32xf32>
    %30 = arith.addf %27, %29 : vector<8x32xf32>
    %cst_23 = arith.constant dense<0x7F800000> : vector<8xf32>
    %31 = vector.multi_reduction <minimumf>, %30, %cst_23 [1] : vector<8x32xf32> to vector<8xf32>
    %32 = vector.shape_cast %31 : vector<8xf32> to vector<8x1xf32>
    %33 = tpu.iota {dimensions = array<i32: 1>} : vector<8x32xi32>
    %34 = vector.broadcast %32 : vector<8x1xf32> to vector<8x32xf32>
    %35 = arith.cmpf ole, %30, %34 : vector<8x32xf32>
    %c32_i32 = arith.constant 32 : i32
    %36 = vector.broadcast %c32_i32 : i32 to vector<8x32xi32>
    %37 = arith.select %35, %33, %36 : vector<8x32xi1>, vector<8x32xi32>
    %cst_24 = arith.constant dense<2147483647> : vector<8xi32>
    %38 = vector.multi_reduction <minsi>, %37, %cst_24 [1] : vector<8x32xi32> to vector<8xi32>
    %39 = vector.shape_cast %38 : vector<8xi32> to vector<8x1xi32>
    %40 = vector.broadcast %39 : vector<8x1xi32> to vector<8x32xi32>
    %41 = arith.cmpi eq, %33, %40 : vector<8x32xi32>
    %42 = arith.extui %41 : vector<8x32xi1> to vector<8x32xi32>
    %43 = arith.sitofp %42 : vector<8x32xi32> to vector<8x32xf32>
    %cst_25 = arith.constant dense<0.000000e+00> : vector<8x16xf32>
    %44 = tpu.matmul %43, %18, %cst_25 {dimension_numbers = #tpu.dot_dimension_numbers<[1], [0], [0], [1], [0, 0, 1, 1], [], []>} : vector<8x32xf32>, vector<32x16xf32>, vector<8x16xf32> -> vector<8x16xf32>
    %c0_26 = arith.constant 0 : index
    %c0_27 = arith.constant 0 : index
    %45 = vector.load %arg10[%c0_26, %c0_27] : memref<32x16xf32, #tpu.memory_space<vmem>>, vector<32x16xf32>
    %46 = arith.mulf %17, %17 : vector<8x16xf32>
    %cst_28 = arith.constant dense<0.000000e+00> : vector<8xf32>
    %47 = vector.multi_reduction <add>, %46, %cst_28 [1] : vector<8x16xf32> to vector<8xf32>
    %48 = vector.shape_cast %47 : vector<8xf32> to vector<8x1xf32>
    %49 = tpu.transpose %45, [1, 0] : vector<32x16xf32> -> vector<16x32xf32>
    %cst_29 = arith.constant dense<0.000000e+00> : vector<8x32xf32>
    %50 = tpu.matmul %17, %49, %cst_29 {dimension_numbers = #tpu.dot_dimension_numbers<[1], [0], [0], [1], [0, 0, 1, 1], [], []>} : vector<8x16xf32>, vector<16x32xf32>, vector<8x32xf32> -> vector<8x32xf32>
    %cst_30 = arith.constant 2.000000e+00 : f32
    %51 = vector.broadcast %cst_30 : f32 to vector<8x32xf32>
    %52 = arith.mulf %51, %50 : vector<8x32xf32>
    %53 = vector.broadcast %48 : vector<8x1xf32> to vector<8x32xf32>
    %54 = arith.subf %53, %52 : vector<8x32xf32>
    %c0_31 = arith.constant 0 : index
    %c0_32 = arith.constant 0 : index
    %55 = vector.load %arg11[%c0_31, %c0_32] : memref<1x32xf32, #tpu.memory_space<vmem>>, vector<1x32xf32>
    %56 = vector.broadcast %55 : vector<1x32xf32> to vector<8x32xf32>
    %57 = arith.addf %54, %56 : vector<8x32xf32>
    %cst_33 = arith.constant dense<0x7F800000> : vector<8xf32>
    %58 = vector.multi_reduction <minimumf>, %57, %cst_33 [1] : vector<8x32xf32> to vector<8xf32>
    %59 = vector.shape_cast %58 : vector<8xf32> to vector<8x1xf32>
    %60 = tpu.iota {dimensions = array<i32: 1>} : vector<8x32xi32>
    %61 = vector.broadcast %59 : vector<8x1xf32> to vector<8x32xf32>
    %62 = arith.cmpf ole, %57, %61 : vector<8x32xf32>
    %c32_i32_34 = arith.constant 32 : i32
    %63 = vector.broadcast %c32_i32_34 : i32 to vector<8x32xi32>
    %64 = arith.select %62, %60, %63 : vector<8x32xi1>, vector<8x32xi32>
    %cst_35 = arith.constant dense<2147483647> : vector<8xi32>
    %65 = vector.multi_reduction <minsi>, %64, %cst_35 [1] : vector<8x32xi32> to vector<8xi32>
    %66 = vector.shape_cast %65 : vector<8xi32> to vector<8x1xi32>
    %67 = vector.broadcast %66 : vector<8x1xi32> to vector<8x32xi32>
    %68 = arith.cmpi eq, %60, %67 : vector<8x32xi32>
    %69 = arith.extui %68 : vector<8x32xi1> to vector<8x32xi32>
    %70 = arith.sitofp %69 : vector<8x32xi32> to vector<8x32xf32>
    %cst_36 = arith.constant dense<0.000000e+00> : vector<8x16xf32>
    %71 = tpu.matmul %70, %45, %cst_36 {dimension_numbers = #tpu.dot_dimension_numbers<[1], [0], [0], [1], [0, 0, 1, 1], [], []>} : vector<8x32xf32>, vector<32x16xf32>, vector<8x16xf32> -> vector<8x16xf32>
    %c0_37 = arith.constant 0 : index
    %c0_38 = arith.constant 0 : index
    %72 = vector.load %arg12[%c0_37, %c0_38] : memref<16x32xf32, #tpu.memory_space<vmem>>, vector<16x32xf32>
    %cst_39 = arith.constant dense<0.000000e+00> : vector<8x32xf32>
    %73 = tpu.matmul %12, %72, %cst_39 {dimension_numbers = #tpu.dot_dimension_numbers<[1], [0], [0], [1], [0, 0, 1, 1], [], []>} : vector<8x16xf32>, vector<16x32xf32>, vector<8x32xf32> -> vector<8x32xf32>
    %c0_40 = arith.constant 0 : index
    %c0_41 = arith.constant 0 : index
    %74 = vector.load %arg13[%c0_40, %c0_41] : memref<16x32xf32, #tpu.memory_space<vmem>>, vector<16x32xf32>
    %cst_42 = arith.constant dense<0.000000e+00> : vector<8x32xf32>
    %75 = tpu.matmul %44, %74, %cst_42 {dimension_numbers = #tpu.dot_dimension_numbers<[1], [0], [0], [1], [0, 0, 1, 1], [], []>} : vector<8x16xf32>, vector<16x32xf32>, vector<8x32xf32> -> vector<8x32xf32>
    %76 = arith.addf %73, %75 : vector<8x32xf32>
    %c0_43 = arith.constant 0 : index
    %c0_44 = arith.constant 0 : index
    %77 = vector.load %arg14[%c0_43, %c0_44] : memref<1x32xf32, #tpu.memory_space<vmem>>, vector<1x32xf32>
    %78 = vector.broadcast %77 : vector<1x32xf32> to vector<8x32xf32>
    %79 = arith.addf %76, %78 : vector<8x32xf32>
    %cst_45 = arith.constant 0.000000e+00 : f32
    %80 = vector.broadcast %cst_45 : f32 to vector<8x32xf32>
    %81 = arith.maximumf %79, %80 : vector<8x32xf32>
    %c0_46 = arith.constant 0 : index
    %c0_47 = arith.constant 0 : index
    %82 = vector.load %arg15[%c0_46, %c0_47] : memref<32x16xf32, #tpu.memory_space<vmem>>, vector<32x16xf32>
    %cst_48 = arith.constant dense<0.000000e+00> : vector<8x16xf32>
    %83 = tpu.matmul %81, %82, %cst_48 {dimension_numbers = #tpu.dot_dimension_numbers<[1], [0], [0], [1], [0, 0, 1, 1], [], []>} : vector<8x32xf32>, vector<32x16xf32>, vector<8x16xf32> -> vector<8x16xf32>
    %c0_49 = arith.constant 0 : index
    %c0_50 = arith.constant 0 : index
    %84 = vector.load %arg16[%c0_49, %c0_50] : memref<1x16xf32, #tpu.memory_space<vmem>>, vector<1x16xf32>
    %85 = vector.broadcast %84 : vector<1x16xf32> to vector<8x16xf32>
    %86 = arith.addf %83, %85 : vector<8x16xf32>
    %cst_51 = arith.constant -1.000000e+01 : f32
    %cst_52 = arith.constant 1.000000e+01 : f32
    %87 = vector.broadcast %cst_51 : f32 to vector<8x16xf32>
    %88 = arith.maximumf %87, %86 : vector<8x16xf32>
    %89 = vector.broadcast %cst_52 : f32 to vector<8x16xf32>
    %90 = arith.minimumf %89, %88 : vector<8x16xf32>
    %c0_53 = arith.constant 0 : index
    %c0_54 = arith.constant 0 : index
    %91 = vector.load %arg17[%c0_53, %c0_54] : memref<16x32xf32, #tpu.memory_space<vmem>>, vector<16x32xf32>
    %cst_55 = arith.constant dense<0.000000e+00> : vector<8x32xf32>
    %92 = tpu.matmul %12, %91, %cst_55 {dimension_numbers = #tpu.dot_dimension_numbers<[1], [0], [0], [1], [0, 0, 1, 1], [], []>} : vector<8x16xf32>, vector<16x32xf32>, vector<8x32xf32> -> vector<8x32xf32>
    %c0_56 = arith.constant 0 : index
    %c0_57 = arith.constant 0 : index
    %93 = vector.load %arg18[%c0_56, %c0_57] : memref<16x32xf32, #tpu.memory_space<vmem>>, vector<16x32xf32>
    %cst_58 = arith.constant dense<0.000000e+00> : vector<8x32xf32>
    %94 = tpu.matmul %44, %93, %cst_58 {dimension_numbers = #tpu.dot_dimension_numbers<[1], [0], [0], [1], [0, 0, 1, 1], [], []>} : vector<8x16xf32>, vector<16x32xf32>, vector<8x32xf32> -> vector<8x32xf32>
    %95 = arith.addf %92, %94 : vector<8x32xf32>
    %c0_59 = arith.constant 0 : index
    %c0_60 = arith.constant 0 : index
    %96 = vector.load %arg19[%c0_59, %c0_60] : memref<1x32xf32, #tpu.memory_space<vmem>>, vector<1x32xf32>
    %97 = vector.broadcast %96 : vector<1x32xf32> to vector<8x32xf32>
    %98 = arith.addf %95, %97 : vector<8x32xf32>
    %cst_61 = arith.constant 0.000000e+00 : f32
    %99 = vector.broadcast %cst_61 : f32 to vector<8x32xf32>
    %100 = arith.maximumf %98, %99 : vector<8x32xf32>
    %c0_62 = arith.constant 0 : index
    %c0_63 = arith.constant 0 : index
    %101 = vector.load %arg20[%c0_62, %c0_63] : memref<32x16xf32, #tpu.memory_space<vmem>>, vector<32x16xf32>
    %cst_64 = arith.constant dense<0.000000e+00> : vector<8x16xf32>
    %102 = tpu.matmul %100, %101, %cst_64 {dimension_numbers = #tpu.dot_dimension_numbers<[1], [0], [0], [1], [0, 0, 1, 1], [], []>} : vector<8x32xf32>, vector<32x16xf32>, vector<8x16xf32> -> vector<8x16xf32>
    %c0_65 = arith.constant 0 : index
    %c0_66 = arith.constant 0 : index
    %103 = vector.load %arg21[%c0_65, %c0_66] : memref<1x16xf32, #tpu.memory_space<vmem>>, vector<1x16xf32>
    %104 = vector.broadcast %103 : vector<1x16xf32> to vector<8x16xf32>
    %105 = arith.addf %102, %104 : vector<8x16xf32>
    %cst_67 = arith.constant 5.000000e-01 : f32
    %106 = vector.broadcast %cst_67 : f32 to vector<8x16xf32>
    %107 = arith.mulf %106, %105 : vector<8x16xf32>
    %108 = math.exp %107 : vector<8x16xf32>
    %c0_68 = arith.constant 0 : index
    %c0_69 = arith.constant 0 : index
    %109 = vector.load %arg1[%c0_68, %c0_69] : memref<8x16xf32, #tpu.memory_space<vmem>>, vector<8x16xf32>
    %110 = arith.mulf %108, %109 : vector<8x16xf32>
    %111 = arith.addf %90, %110 : vector<8x16xf32>
    %cst_70 = arith.constant 0.000000e+00 : f32
    %112 = vector.broadcast %cst_70 : f32 to vector<8x16xf32>
    %113 = tpu.concatenate %44, %71, %43, %70, %111, %112 in 1 : vector<8x16xf32>, vector<8x16xf32>, vector<8x32xf32>, vector<8x32xf32>, vector<8x16xf32>, vector<8x16xf32> -> vector<8x128xf32>
    %c0_71 = arith.constant 0 : index
    %c0_72 = arith.constant 0 : index
    %114 = vector.load %arg22[%c0_71, %c0_72] : memref<8x128xf32, #tpu.memory_space<vmem>>, vector<8x128xf32>
    tpu.vector_store %arg22[%c0_71, %c0_72], %113 {strides = array<i32>} : memref<8x128xf32, #tpu.memory_space<vmem>>, vector<8x128xf32>,
    return
  }
}

</mosaic_0001>

<llo_original>
// kernel: causal_model_forward.1
$region0: #{causal_model_forward.1}
  #allocation0 [shape = 'u32[]', space=smem, size = 0x4, offset = 0x4, fixed_abs, tag = 'smem constant byte address 0x4 - core index']
  #allocation1 [shape = 'u32[144,128]{1,0:T(1,128)}', space=vmem, size = 0x12000, scoped, tag = 'internal scratch']
  %s0 = inlined_call_operand.vmem [shape: f32[8,32], index: 0, kind: input, shape index: {}]
  %s1 = inlined_call_operand.vmem [shape: f32[8,16], index: 1, kind: input, shape index: {}]
  %s2 = inlined_call_operand.vmem [shape: f32[32,32], index: 2, kind: input, shape index: {}]
  %s3 = inlined_call_operand.vmem [shape: f32[1,32], index: 3, kind: input, shape index: {}]
  %s4 = inlined_call_operand.vmem [shape: f32[32,16], index: 4, kind: input, shape index: {}]
  %s5 = inlined_call_operand.vmem [shape: f32[1,16], index: 5, kind: input, shape index: {}]
  %s6 = inlined_call_operand.vmem [shape: f32[32,16], index: 6, kind: input, shape index: {}]
  %s7 = inlined_call_operand.vmem [shape: f32[1,16], index: 7, kind: input, shape index: {}]
  %s8 = inlined_call_operand.vmem [shape: f32[32,16], index: 8, kind: input, shape index: {}]
  %s9 = inlined_call_operand.vmem [shape: f32[1,32], index: 9, kind: input, shape index: {}]
  %s10 = inlined_call_operand.vmem [shape: f32[32,16], index: 10, kind: input, shape index: {}]
  %s11 = inlined_call_operand.vmem [shape: f32[1,32], index: 11, kind: input, shape index: {}]
  %s12 = inlined_call_operand.vmem [shape: f32[16,32], index: 12, kind: input, shape index: {}]
  %s13 = inlined_call_operand.vmem [shape: f32[16,32], index: 13, kind: input, shape index: {}]
  %s14 = inlined_call_operand.vmem [shape: f32[1,32], index: 14, kind: input, shape index: {}]
  %s15 = inlined_call_operand.vmem [shape: f32[32,16], index: 15, kind: input, shape index: {}]
  %s16 = inlined_call_operand.vmem [shape: f32[1,16], index: 16, kind: input, shape index: {}]
  %s17 = inlined_call_operand.vmem [shape: f32[16,32], index: 17, kind: input, shape index: {}]
  %s18 = inlined_call_operand.vmem [shape: f32[16,32], index: 18, kind: input, shape index: {}]
  %s19 = inlined_call_operand.vmem [shape: f32[1,32], index: 19, kind: input, shape index: {}]
  %s20 = inlined_call_operand.vmem [shape: f32[32,16], index: 20, kind: input, shape index: {}]
  %s21 = inlined_call_operand.vmem [shape: f32[1,16], index: 21, kind: input, shape index: {}]
  %s22 = inlined_call_operand.vmem [shape: f32[8,128], index: 22, kind: output, shape index: {}]
  %s23 = sld [smem:[#allocation0]]
  $region98: #{causal_model_forward.1} parent=0
    _
  %s25 = ssub.s32 1, %s23
  %s26 = scalar_select 0, %s25, %s23
  // Predicated region
  $region2: #{causal_model_forward.1} parent=0 // pred_check
    _
  $region3: #{causal_model_forward.1} parent=0 // pred_check_branch
    %28 = sbr.rel (0) target = $region5
  $region4: #{causal_model_forward.1} parent=0 // pred_region
    _
  $region5: #{causal_model_forward.1} parent=0 // pred_fallthru
    _
  // Predicated region
  $region6: #{causal_model_forward.1} parent=0 // pred_check
    _
  $region7: #{causal_model_forward.1} parent=0 // pred_check_branch
    %30 = sbr.rel (0) target = $region9
  $region8: #{causal_model_forward.1} parent=0 // pred_region
    _
  $region9: #{causal_model_forward.1} parent=0 // pred_fallthru
    _
  // Predicated region
  $region10: #{causal_model_forward.1} parent=0 // pred_check
    _
  $region11: #{causal_model_forward.1} parent=0 // pred_check_branch
    %32 = sbr.rel (0) target = $region13
  $region12: #{causal_model_forward.1} parent=0 // pred_region
    _
  $region13: #{causal_model_forward.1} parent=0 // pred_fallthru
    _
  // Predicated region
  $region14: #{causal_model_forward.1} parent=0 // pred_check
    _
  $region15: #{causal_model_forward.1} parent=0 // pred_check_branch
    %34 = sbr.rel (0) target = $region17
  $region16: #{causal_model_forward.1} parent=0 // pred_region
    _
  $region17: #{causal_model_forward.1} parent=0 // pred_fallthru
    _
  // Predicated region
  $region18: #{causal_model_forward.1} parent=0 // pred_check
    _
  $region19: #{causal_model_forward.1} parent=0 // pred_check_branch
    %36 = sbr.rel (0) target = $region21
  $region20: #{causal_model_forward.1} parent=0 // pred_region
    _
  $region21: #{causal_model_forward.1} parent=0 // pred_fallthru
    _
  // Predicated region
  $region22: #{causal_model_forward.1} parent=0 // pred_check
    _
  $region23: #{causal_model_forward.1} parent=0 // pred_check_branch
    %38 = sbr.rel (0) target = $region25
  $region24: #{causal_model_forward.1} parent=0 // pred_region
    _
  $region25: #{causal_model_forward.1} parent=0 // pred_fallthru
    _
  // Predicated region
  $region26: #{causal_model_forward.1} parent=0 // pred_check
    _
  $region27: #{causal_model_forward.1} parent=0 // pred_check_branch
    %40 = sbr.rel (0) target = $region29
  $region28: #{causal_model_forward.1} parent=0 // pred_region
    _
  $region29: #{causal_model_forward.1} parent=0 // pred_fallthru
    _
  // Predicated region
  $region30: #{causal_model_forward.1} parent=0 // pred_check
    _
  $region31: #{causal_model_forward.1} parent=0 // pred_check_branch
    %42 = sbr.rel (0) target = $region33
  $region32: #{causal_model_forward.1} parent=0 // pred_region
    _
  $region33: #{causal_model_forward.1} parent=0 // pred_fallthru
    _
  // Predicated region
  $region34: #{causal_model_forward.1} parent=0 // pred_check
    _
  $region35: #{causal_model_forward.1} parent=0 // pred_check_branch
    %44 = sbr.rel (0) target = $region37
  $region36: #{causal_model_forward.1} parent=0 // pred_region
    _
  $region37: #{causal_model_forward.1} parent=0 // pred_fallthru
    _
  // Predicated region
  $region38: #{causal_model_forward.1} parent=0 // pred_check
    _
  $region39: #{causal_model_forward.1} parent=0 // pred_check_branch
    %46 = sbr.rel (0) target = $region41
  $region40: #{causal_model_forward.1} parent=0 // pred_region
    _
  $region41: #{causal_model_forward.1} parent=0 // pred_fallthru
    _
  // Predicated region
  $region42: #{causal_model_forward.1} parent=0 // pred_check
    _
  $region43: #{causal_model_forward.1} parent=0 // pred_check_branch
    %48 = sbr.rel (0) target = $region45
  $region44: #{causal_model_forward.1} parent=0 // pred_region
    _
  $region45: #{causal_model_forward.1} parent=0 // pred_fallthru
    _
  // Predicated region
  $region46: #{causal_model_forward.1} parent=0 // pred_check
    _
  $region47: #{causal_model_forward.1} parent=0 // pred_check_branch
    %50 = sbr.rel (0) target = $region49
  $region48: #{causal_model_forward.1} parent=0 // pred_region
    _
  $region49: #{causal_model_forward.1} parent=0 // pred_fallthru
    _
  // Predicated region
  $region50: #{causal_model_forward.1} parent=0 // pred_check
    _
  $region51: #{causal_model_forward.1} parent=0 // pred_check_branch
    %52 = sbr.rel (0) target = $region53
  $region52: #{causal_model_forward.1} parent=0 // pred_region
    _
  $region53: #{causal_model_forward.1} parent=0 // pred_fallthru
    _
  // Predicated region
  $region54: #{causal_model_forward.1} parent=0 // pred_check
    _
  $region55: #{causal_model_forward.1} parent=0 // pred_check_branch
    %54 = sbr.rel (0) target = $region57
  $region56: #{causal_model_forward.1} parent=0 // pred_region
    _
  $region57: #{causal_model_forward.1} parent=0 // pred_fallthru
    _
  // Predicated region
  $region58: #{causal_model_forward.1} parent=0 // pred_check
    _
  $region59: #{causal_model_forward.1} parent=0 // pred_check_branch
    %56 = sbr.rel (0) target = $region61
  $region60: #{causal_model_forward.1} parent=0 // pred_region
    _
  $region61: #{causal_model_forward.1} parent=0 // pred_fallthru
    _
  // Predicated region
  $region62: #{causal_model_forward.1} parent=0 // pred_check
    _
  $region63: #{causal_model_forward.1} parent=0 // pred_check_branch
    %58 = sbr.rel (0) target = $region65
  $region64: #{causal_model_forward.1} parent=0 // pred_region
    _
  $region65: #{causal_model_forward.1} parent=0 // pred_fallthru
    _
  // Predicated region
  $region66: #{causal_model_forward.1} parent=0 // pred_check
    _
  $region67: #{causal_model_forward.1} parent=0 // pred_check_branch
    %60 = sbr.rel (0) target = $region69
  $region68: #{causal_model_forward.1} parent=0 // pred_region
    _
  $region69: #{causal_model_forward.1} parent=0 // pred_fallthru
    _
  // Predicated region
  $region70: #{causal_model_forward.1} parent=0 // pred_check
    _
  $region71: #{causal_model_forward.1} parent=0 // pred_check_branch
    %62 = sbr.rel (0) target = $region73
  $region72: #{causal_model_forward.1} parent=0 // pred_region
    _
  $region73: #{causal_model_forward.1} parent=0 // pred_fallthru
    _
  // Predicated region
  $region74: #{causal_model_forward.1} parent=0 // pred_check
    _
  $region75: #{causal_model_forward.1} parent=0 // pred_check_branch
    %64 = sbr.rel (0) target = $region77
  $region76: #{causal_model_forward.1} parent=0 // pred_region
    _
  $region77: #{causal_model_forward.1} parent=0 // pred_fallthru
    _
  // Predicated region
  $region78: #{causal_model_forward.1} parent=0 // pred_check
    _
  $region79: #{causal_model_forward.1} parent=0 // pred_check_branch
    %66 = sbr.rel (0) target = $region81
  $region80: #{causal_model_forward.1} parent=0 // pred_region
    _
  $region81: #{causal_model_forward.1} parent=0 // pred_fallthru
    _
  // Predicated region
  $region82: #{causal_model_forward.1} parent=0 // pred_check
    _
  $region83: #{causal_model_forward.1} parent=0 // pred_check_branch
    %68 = sbr.rel (0) target = $region85
  $region84: #{causal_model_forward.1} parent=0 // pred_region
    _
  $region85: #{causal_model_forward.1} parent=0 // pred_fallthru
    _
  // Predicated region
  $region86: #{causal_model_forward.1} parent=0 // pred_check
    _
  $region87: #{causal_model_forward.1} parent=0 // pred_check_branch
    %70 = sbr.rel (0) target = $region89
  $region88: #{causal_model_forward.1} parent=0 // pred_region
    _
  $region89: #{causal_model_forward.1} parent=0 // pred_fallthru
    _
  %v71 = vld [vmem:[%s0] sm:$0xff]
  %v72 = vld [vmem:[%s2] sm:$0xff]
  %v73 = vld [vmem:[%s2 + $0x8] sm:$0xff]
  %v74 = vld [vmem:[%s2 + $0x10] sm:$0xff]
  %v75 = vld [vmem:[%s2 + $0x18] sm:$0xff]
  %v76 = vld [vmem:[%s3] sm:$0x1]
  %v78 = vlaneseq
  %v79 = vshrl.u32 %v78, 7
  %v80 = vsub.s32 0, %v79
  %v81 = vrot.slane %v76, %v80
  %vm83 = vcmask 261120
  %v85 = vsel %vm83, %v71, 0
  %87 = vmatprep.subr.mxu0 0.0
  %88 = vmatpush1.msra.mxu0 %v72
  %89 = vmatprep.subr.mxu0 0.0
  %90 = vmatpush1.msra.mxu0 %v73
  %91 = vmatprep.subr.mxu0 0.0
  %92 = vmatpush1.msra.mxu0 %v74
  %93 = vmatprep.subr.mxu0 0.0
  %94 = vmatpush1.msra.mxu0 %v75
  %95 = vmatprep.subr.mxu0 0.0
  %96 = vmatpush1.msra.mxu0 0.0
  %97 = vmatprep.subr.mxu0 0.0
  %98 = vmatpush1.msra.mxu0 0.0
  %99 = vmatprep.subr.mxu0 0.0
  %100 = vmatpush1.msra.mxu0 0.0
  %101 = vmatprep.subr.mxu0 0.0
  %102 = vmatpush1.msra.mxu0 0.0
  %103 = vmatprep.subr.mxu0 0.0
  %104 = vmatpush1.msra.mxu0 0.0
  %105 = vmatprep.subr.mxu0 0.0
  %106 = vmatpush1.msra.mxu0 0.0
  %107 = vmatprep.subr.mxu0 0.0
  %108 = vmatpush1.msra.mxu0 0.0
  %109 = vmatprep.subr.mxu0 0.0
  %110 = vmatpush1.msra.mxu0 0.0
  %111 = vmatprep.subr.mxu0 0.0
  %112 = vmatpush1.msra.mxu0 0.0
  %113 = vmatprep.subr.mxu0 0.0
  %114 = vmatpush1.msra.mxu0 0.0
  %115 = vmatprep.subr.mxu0 0.0
  %116 = vmatpush1.msra.mxu0 0.0
  %117 = vmatprep.subr.mxu0 0.0
  %118 = vmatpush1.msra.mxu0 0.0
  %119 = vmatprep.subr.mxu0 0.0
  %120 = vmatpush1.msra.mxu0 0.0
  %121 = vmatprep.subr.mxu0 0.0
  %122 = vmatpush1.msra.mxu0 0.0
  %123 = vmatprep.subr.mxu0 0.0
  %124 = vmatpush1.msra.mxu0 0.0
  %125 = vmatprep.subr.mxu0 0.0
  %126 = vmatpush1.msra.mxu0 0.0
  %127 = vmatprep.subr.mxu0 0.0
  %128 = vmatpush1.msra.mxu0 0.0
  %129 = vmatprep.subr.mxu0 0.0
  %130 = vmatpush1.msra.mxu0 0.0
  %131 = vmatprep.subr.mxu0 0.0
  %132 = vmatpush1.msra.mxu0 0.0
  %133 = vmatprep.subr.mxu0 0.0
  %134 = vmatpush1.msra.mxu0 0.0
  %135 = vmatprep.subr.mxu0 0.0
  %136 = vmatpush1.msra.mxu0 0.0
  %137 = vmatprep.subr.mxu0 0.0
  %138 = vmatpush1.msra.mxu0 0.0
  %139 = vmatprep.subr.mxu0 0.0
  %140 = vmatpush1.msra.mxu0 0.0
  %141 = vmatprep.subr.mxu0 0.0
  %142 = vmatpush1.msra.mxu0 0.0
  %143 = vmatprep.subr.mxu0 0.0
  %144 = vmatpush1.msra.mxu0 0.0
  %145 = vmatprep.subr.mxu0 0.0
  %146 = vmatpush1.msra.mxu0 0.0
  %147 = vmatprep.subr.mxu0 0.0
  %148 = vmatpush1.msra.mxu0 0.0
  %149 = vmatprep.subr.mxu0 0.0
  %150 = vmatpush1.msra.mxu0 0.0
  %151 = vmatprep.mubr.f32.mxu0 0.0
  %152 = vmatmul.mubr.f32.gmra.mrb[0].mxu0 %v85
  %v153 = vpop.f32.mrb[0].mxu0
  %v154 = vadd.f32 %v81, %v153
  %v155 = vpop.f32.mrb[0].mxu0
  %156 = vdwg.mxu0
  %v157 = vmax.f32 %v154, 0.0
  %v158 = vld [vmem:[%s4] sm:$0xff]
  %v159 = vld [vmem:[%s4 + $0x8] sm:$0xff]
  %v160 = vld [vmem:[%s4 + $0x10] sm:$0xff]
  %v161 = vld [vmem:[%s4 + $0x18] sm:$0xff]
  %v162 = vld [vmem:[%s5] sm:$0x1]
  %v164 = vlaneseq
  %v165 = vshrl.u32 %v164, 7
  %v166 = vsub.s32 0, %v165
  %v167 = vrot.slane %v162, %v166
  %v170 = vsel %vm83, %v157, 0
  %172 = vmatprep.subr.mxu0 0.0
  %173 = vmatpush1.msra.mxu0 %v158
  %174 = vmatprep.subr.mxu0 0.0
  %175 = vmatpush1.msra.mxu0 %v159
  %176 = vmatprep.subr.mxu0 0.0
  %177 = vmatpush1.msra.mxu0 %v160
  %178 = vmatprep.subr.mxu0 0.0
  %179 = vmatpush1.msra.mxu0 %v161
  %180 = vmatprep.subr.mxu0 0.0
  %181 = vmatpush1.msra.mxu0 0.0
  %182 = vmatprep.subr.mxu0 0.0
  %183 = vmatpush1.msra.mxu0 0.0
  %184 = vmatprep.subr.mxu0 0.0
  %185 = vmatpush1.msra.mxu0 0.0
  %186 = vmatprep.subr.mxu0 0.0
  %187 = vmatpush1.msra.mxu0 0.0
  %188 = vmatprep.subr.mxu0 0.0
  %189 = vmatpush1.msra.mxu0 0.0
  %190 = vmatprep.subr.mxu0 0.0
  %191 = vmatpush1.msra.mxu0 0.0
  %192 = vmatprep.subr.mxu0 0.0
  %193 = vmatpush1.msra.mxu0 0.0
  %194 = vmatprep.subr.mxu0 0.0
  %195 = vmatpush1.msra.mxu0 0.0
  %196 = vmatprep.subr.mxu0 0.0
  %197 = vmatpush1.msra.mxu0 0.0
  %198 = vmatprep.subr.mxu0 0.0
  %199 = vmatpush1.msra.mxu0 0.0
  %200 = vmatprep.subr.mxu0 0.0
  %201 = vmatpush1.msra.mxu0 0.0
  %202 = vmatprep.subr.mxu0 0.0
  %203 = vmatpush1.msra.mxu0 0.0
  %204 = vmatprep.subr.mxu0 0.0
  %205 = vmatpush1.msra.mxu0 0.0
  %206 = vmatprep.subr.mxu0 0.0
  %207 = vmatpush1.msra.mxu0 0.0
  %208 = vmatprep.subr.mxu0 0.0
  %209 = vmatpush1.msra.mxu0 0.0
  %210 = vmatprep.subr.mxu0 0.0
  %211 = vmatpush1.msra.mxu0 0.0
  %212 = vmatprep.subr.mxu0 0.0
  %213 = vmatpush1.msra.mxu0 0.0
  %214 = vmatprep.subr.mxu0 0.0
  %215 = vmatpush1.msra.mxu0 0.0
  %216 = vmatprep.subr.mxu0 0.0
  %217 = vmatpush1.msra.mxu0 0.0
  %218 = vmatprep.subr.mxu0 0.0
  %219 = vmatpush1.msra.mxu0 0.0
  %220 = vmatprep.subr.mxu0 0.0
  %221 = vmatpush1.msra.mxu0 0.0
  %222 = vmatprep.subr.mxu0 0.0
  %223 = vmatpush1.msra.mxu0 0.0
  %224 = vmatprep.subr.mxu0 0.0
  %225 = vmatpush1.msra.mxu0 0.0
  %226 = vmatprep.subr.mxu0 0.0
  %227 = vmatpush1.msra.mxu0 0.0
  %228 = vmatprep.subr.mxu0 0.0
  %229 = vmatpush1.msra.mxu0 0.0
  %230 = vmatprep.subr.mxu0 0.0
  %231 = vmatpush1.msra.mxu0 0.0
  %232 = vmatprep.subr.mxu0 0.0
  %233 = vmatpush1.msra.mxu0 0.0
  %234 = vmatprep.subr.mxu0 0.0
  %235 = vmatpush1.msra.mxu0 0.0
  %236 = vmatprep.mubr.f32.mxu0 0.0
  %237 = vmatmul.mubr.f32.gmra.mrb[0].mxu0 %v170
  %v238 = vpop.f32.mrb[0].mxu0
  %v239 = vadd.f32 %v167, %v238
  %v240 = vpop.f32.mrb[0].mxu0
  %241 = vdwg.mxu0
  %v242 = vld [vmem:[%s6] sm:$0xff]
  %v243 = vld [vmem:[%s6 + $0x8] sm:$0xff]
  %v244 = vld [vmem:[%s6 + $0x10] sm:$0xff]
  %v245 = vld [vmem:[%s6 + $0x18] sm:$0xff]
  %v246 = vld [vmem:[%s7] sm:$0x1]
  %v248 = vlaneseq
  %v249 = vshrl.u32 %v248, 7
  %v250 = vsub.s32 0, %v249
  %v251 = vrot.slane %v246, %v250
  %253 = vmatprep.subr.mxu0 0.0
  %254 = vmatpush1.msra.mxu0 %v242
  %255 = vmatprep.subr.mxu0 0.0
  %256 = vmatpush1.msra.mxu0 %v243
  %257 = vmatprep.subr.mxu0 0.0
  %258 = vmatpush1.msra.mxu0 %v244
  %259 = vmatprep.subr.mxu0 0.0
  %260 = vmatpush1.msra.mxu0 %v245
  %261 = vmatprep.subr.mxu0 0.0
  %262 = vmatpush1.msra.mxu0 0.0
  %263 = vmatprep.subr.mxu0 0.0
  %264 = vmatpush1.msra.mxu0 0.0
  %265 = vmatprep.subr.mxu0 0.0
  %266 = vmatpush1.msra.mxu0 0.0
  %267 = vmatprep.subr.mxu0 0.0
  %268 = vmatpush1.msra.mxu0 0.0
  %269 = vmatprep.subr.mxu0 0.0
  %270 = vmatpush1.msra.mxu0 0.0
  %271 = vmatprep.subr.mxu0 0.0
  %272 = vmatpush1.msra.mxu0 0.0
  %273 = vmatprep.subr.mxu0 0.0
  %274 = vmatpush1.msra.mxu0 0.0
  %275 = vmatprep.subr.mxu0 0.0
  %276 = vmatpush1.msra.mxu0 0.0
  %277 = vmatprep.subr.mxu0 0.0
  %278 = vmatpush1.msra.mxu0 0.0
  %279 = vmatprep.subr.mxu0 0.0
  %280 = vmatpush1.msra.mxu0 0.0
  %281 = vmatprep.subr.mxu0 0.0
  %282 = vmatpush1.msra.mxu0 0.0
  %283 = vmatprep.subr.mxu0 0.0
  %284 = vmatpush1.msra.mxu0 0.0
  %285 = vmatprep.subr.mxu0 0.0
  %286 = vmatpush1.msra.mxu0 0.0
  %287 = vmatprep.subr.mxu0 0.0
  %288 = vmatpush1.msra.mxu0 0.0
  %289 = vmatprep.subr.mxu0 0.0
  %290 = vmatpush1.msra.mxu0 0.0
  %291 = vmatprep.subr.mxu0 0.0
  %292 = vmatpush1.msra.mxu0 0.0
  %293 = vmatprep.subr.mxu0 0.0
  %294 = vmatpush1.msra.mxu0 0.0
  %295 = vmatprep.subr.mxu0 0.0
  %296 = vmatpush1.msra.mxu0 0.0
  %297 = vmatprep.subr.mxu0 0.0
  %298 = vmatpush1.msra.mxu0 0.0
  %299 = vmatprep.subr.mxu0 0.0
  %300 = vmatpush1.msra.mxu0 0.0
  %301 = vmatprep.subr.mxu0 0.0
  %302 = vmatpush1.msra.mxu0 0.0
  %303 = vmatprep.subr.mxu0 0.0
  %304 = vmatpush1.msra.mxu0 0.0
  %305 = vmatprep.subr.mxu0 0.0
  %306 = vmatpush1.msra.mxu0 0.0
  %307 = vmatprep.subr.mxu0 0.0
  %308 = vmatpush1.msra.mxu0 0.0
  %309 = vmatprep.subr.mxu0 0.0
  %310 = vmatpush1.msra.mxu0 0.0
  %311 = vmatprep.subr.mxu0 0.0
  %312 = vmatpush1.msra.mxu0 0.0
  %313 = vmatprep.subr.mxu0 0.0
  %314 = vmatpush1.msra.mxu0 0.0
  %315 = vmatprep.subr.mxu0 0.0
  %316 = vmatpush1.msra.mxu0 0.0
  %317 = vmatprep.mubr.f32.mxu0 0.0
  %318 = vmatmul.mubr.f32.gmra.mrb[0].mxu0 %v170
  %v319 = vpop.f32.mrb[0].mxu0
  %v320 = vadd.f32 %v251, %v319
  %v321 = vpop.f32.mrb[0].mxu0
  %322 = vdwg.mxu0
  %v323 = vld [vmem:[%s8] sm:$0xff]
  %v324 = vld [vmem:[%s8 + $0x8] sm:$0xff]
  %v325 = vld [vmem:[%s8 + $0x10] sm:$0xff]
  %v326 = vld [vmem:[%s8 + $0x18] sm:$0xff]
  %v327 = vmul.f32 %v239, %v239
  %vm328 = vcmask 130048
  %v329 = vsel %vm328, %v327, 0.0
  %330 = vadd.xlane.f32.xlu0 %v329
  %v331 = vpop.xlane.xlu0 %330
  %v333 = vsel %vm328, %v239, 0
  %v336 = vsel %vm328, %v323, 0
  %v339 = vsel %vm328, %v324, 0
  %v342 = vsel %vm328, %v325, 0
  %v345 = vsel %vm328, %v326, 0
  %347 = vmatprep.subr.mxu0 0.0
  %348 = vmatpush1.xpose.msra.mxu0 %v336
  %349 = vmatprep.subr.mxu0 0.0
  %350 = vmatpush1.xpose.msra.mxu0 %v339
  %351 = vmatprep.subr.mxu0 0.0
  %352 = vmatpush1.xpose.msra.mxu0 %v342
  %353 = vmatprep.subr.mxu0 0.0
  %354 = vmatpush1.xpose.msra.mxu0 %v345
  %355 = vmatprep.subr.mxu0 0.0
  %356 = vmatpush1.xpose.msra.mxu0 0.0
  %357 = vmatprep.subr.mxu0 0.0
  %358 = vmatpush1.xpose.msra.mxu0 0.0
  %359 = vmatprep.subr.mxu0 0.0
  %360 = vmatpush1.xpose.msra.mxu0 0.0
  %361 = vmatprep.subr.mxu0 0.0
  %362 = vmatpush1.xpose.msra.mxu0 0.0
  %363 = vmatprep.subr.mxu0 0.0
  %364 = vmatpush1.xpose.msra.mxu0 0.0
  %365 = vmatprep.subr.mxu0 0.0
  %366 = vmatpush1.xpose.msra.mxu0 0.0
  %367 = vmatprep.subr.mxu0 0.0
  %368 = vmatpush1.xpose.msra.mxu0 0.0
  %369 = vmatprep.subr.mxu0 0.0
  %370 = vmatpush1.xpose.msra.mxu0 0.0
  %371 = vmatprep.subr.mxu0 0.0
  %372 = vmatpush1.xpose.msra.mxu0 0.0
  %373 = vmatprep.subr.mxu0 0.0
  %374 = vmatpush1.xpose.msra.mxu0 0.0
  %375 = vmatprep.subr.mxu0 0.0
  %376 = vmatpush1.xpose.msra.mxu0 0.0
  %377 = vmatprep.subr.mxu0 0.0
  %378 = vmatpush1.xpose.msra.mxu0 0.0
  %379 = vmatprep.subr.mxu0 0.0
  %380 = vmatpush1.xpose.msra.mxu0 0.0
  %381 = vmatprep.subr.mxu0 0.0
  %382 = vmatpush1.xpose.msra.mxu0 0.0
  %383 = vmatprep.subr.mxu0 0.0
  %384 = vmatpush1.xpose.msra.mxu0 0.0
  %385 = vmatprep.subr.mxu0 0.0
  %386 = vmatpush1.xpose.msra.mxu0 0.0
  %387 = vmatprep.subr.mxu0 0.0
  %388 = vmatpush1.xpose.msra.mxu0 0.0
  %389 = vmatprep.subr.mxu0 0.0
  %390 = vmatpush1.xpose.msra.mxu0 0.0
  %391 = vmatprep.subr.mxu0 0.0
  %392 = vmatpush1.xpose.msra.mxu0 0.0
  %393 = vmatprep.subr.mxu0 0.0
  %394 = vmatpush1.xpose.msra.mxu0 0.0
  %395 = vmatprep.subr.mxu0 0.0
  %396 = vmatpush1.xpose.msra.mxu0 0.0
  %397 = vmatprep.subr.mxu0 0.0
  %398 = vmatpush1.xpose.msra.mxu0 0.0
  %399 = vmatprep.subr.mxu0 0.0
  %400 = vmatpush1.xpose.msra.mxu0 0.0
  %401 = vmatprep.subr.mxu0 0.0
  %402 = vmatpush1.xpose.msra.mxu0 0.0
  %403 = vmatprep.subr.mxu0 0.0
  %404 = vmatpush1.xpose.msra.mxu0 0.0
  %405 = vmatprep.subr.mxu0 0.0
  %406 = vmatpush1.xpose.msra.mxu0 0.0
  %407 = vmatprep.subr.mxu0 0.0
  %408 = vmatpush1.xpose.msra.mxu0 0.0
  %409 = vmatprep.subr.mxu0 0.0
  %410 = vmatpush1.xpose.msra.mxu0 0.0
  %411 = vmatprep.mubr.f32.mxu0 0.0
  %412 = vmatmul.mubr.f32.gmra.mrb[0].mxu0 %v333
  %v413 = vpop.f32.mrb[0].mxu0
  %v414 = vadd.f32 0.0, %v413
  %v415 = vpop.f32.mrb[0].mxu0
  %416 = vdwg.mxu0
  %v417 = vmul.f32 %v414, 2.0
  %v418 = vsub.f32 %v331, %v417
  %v419 = vld [vmem:[%s9] sm:$0x1]
  %v421 = vlaneseq
  %v422 = vshrl.u32 %v421, 7
  %v423 = vsub.s32 0, %v422
  %v424 = vrot.slane %v419, %v423
  %v426 = vadd.f32 %v418, %v424
  %v427 = vsel %vm83, %v426, inf
  %428 = vmin.xlane.f32.xlu0 %v427
  %v429 = vpop.xlane.xlu0 %428
  %v430 = vlaneseq
  %v431 = vand.u32 %v430, 127
  %vm432 = vcmp.le.f32.partialorder %v426, %v429
  %v433 = vsel %vm432, %v431, 32
  %v434 = vsel %vm83, %v433, 2147483647
  %v435 = vand.u32 %v434, 65535
  %v436 = vshra.s32 %v434, 16
  %v437 = vcvt.s32.f32 %v435
  %v438 = vcvt.s32.f32 %v436
  %439 = vmin.xlane.f32.xlu0 %v438
  %v440 = vpop.xlane.xlu0 %439
  %vm441 = vcmp.eq.f32.partialorder %v438, %v440
  %v442 = vsel %vm441, %v437, inf
  %443 = vmin.xlane.f32.xlu0 %v442
  %v444 = vpop.xlane.xlu0 %443
  %v445 = vcvt.f32.s32 %v444
  %v446 = vcvt.f32.s32 %v440
  %v447 = vshll.u32 %v446, 16
  %v448 = vadd.s32 %v447, %v445
  %vm449 = vcmp.eq.s32.totalorder %v431, %v448
  %v450 = vsel %vm449, 1, 0
  %v451 = vcvt.s32.f32 %v450
  %v453 = vsel %vm83, %v451, 0
  %455 = vmatprep.subr.mxu0 0.0
  %456 = vmatpush1.msra.mxu0 %v323
  %457 = vmatprep.subr.mxu0 0.0
  %458 = vmatpush1.msra.mxu0 %v324
  %459 = vmatprep.subr.mxu0 0.0
  %460 = vmatpush1.msra.mxu0 %v325
  %461 = vmatprep.subr.mxu0 0.0
  %462 = vmatpush1.msra.mxu0 %v326
  %463 = vmatprep.subr.mxu0 0.0
  %464 = vmatpush1.msra.mxu0 0.0
  %465 = vmatprep.subr.mxu0 0.0
  %466 = vmatpush1.msra.mxu0 0.0
  %467 = vmatprep.subr.mxu0 0.0
  %468 = vmatpush1.msra.mxu0 0.0
  %469 = vmatprep.subr.mxu0 0.0
  %470 = vmatpush1.msra.mxu0 0.0
  %471 = vmatprep.subr.mxu0 0.0
  %472 = vmatpush1.msra.mxu0 0.0
  %473 = vmatprep.subr.mxu0 0.0
  %474 = vmatpush1.msra.mxu0 0.0
  %475 = vmatprep.subr.mxu0 0.0
  %476 = vmatpush1.msra.mxu0 0.0
  %477 = vmatprep.subr.mxu0 0.0
  %478 = vmatpush1.msra.mxu0 0.0
  %479 = vmatprep.subr.mxu0 0.0
  %480 = vmatpush1.msra.mxu0 0.0
  %481 = vmatprep.subr.mxu0 0.0
  %482 = vmatpush1.msra.mxu0 0.0
  %483 = vmatprep.subr.mxu0 0.0
  %484 = vmatpush1.msra.mxu0 0.0
  %485 = vmatprep.subr.mxu0 0.0
  %486 = vmatpush1.msra.mxu0 0.0
  %487 = vmatprep.subr.mxu0 0.0
  %488 = vmatpush1.msra.mxu0 0.0
  %489 = vmatprep.subr.mxu0 0.0
  %490 = vmatpush1.msra.mxu0 0.0
  %491 = vmatprep.subr.mxu0 0.0
  %492 = vmatpush1.msra.mxu0 0.0
  %493 = vmatprep.subr.mxu0 0.0
  %494 = vmatpush1.msra.mxu0 0.0
  %495 = vmatprep.subr.mxu0 0.0
  %496 = vmatpush1.msra.mxu0 0.0
  %497 = vmatprep.subr.mxu0 0.0
  %498 = vmatpush1.msra.mxu0 0.0
  %499 = vmatprep.subr.mxu0 0.0
  %500 = vmatpush1.msra.mxu0 0.0
  %501 = vmatprep.subr.mxu0 0.0
  %502 = vmatpush1.msra.mxu0 0.0
  %503 = vmatprep.subr.mxu0 0.0
  %504 = vmatpush1.msra.mxu0 0.0
  %505 = vmatprep.subr.mxu0 0.0
  %506 = vmatpush1.msra.mxu0 0.0
  %507 = vmatprep.subr.mxu0 0.0
  %508 = vmatpush1.msra.mxu0 0.0
  %509 = vmatprep.subr.mxu0 0.0
  %510 = vmatpush1.msra.mxu0 0.0
  %511 = vmatprep.subr.mxu0 0.0
  %512 = vmatpush1.msra.mxu0 0.0
  %513 = vmatprep.subr.mxu0 0.0
  %514 = vmatpush1.msra.mxu0 0.0
  %515 = vmatprep.subr.mxu0 0.0
  %516 = vmatpush1.msra.mxu0 0.0
  %517 = vmatprep.subr.mxu0 0.0
  %518 = vmatpush1.msra.mxu0 0.0
  %519 = vmatprep.mubr.f32.mxu0 0.0
  %520 = vmatmul.mubr.f32.gmra.mrb[0].mxu0 %v453
  %v521 = vpop.f32.mrb[0].mxu0
  %v522 = vadd.f32 0.0, %v521
  %v523 = vpop.f32.mrb[0].mxu0
  %524 = vdwg.mxu0
  %v525 = vld [vmem:[%s10] sm:$0xff]
  %v526 = vld [vmem:[%s10 + $0x8] sm:$0xff]
  %v527 = vld [vmem:[%s10 + $0x10] sm:$0xff]
  %v528 = vld [vmem:[%s10 + $0x18] sm:$0xff]
  %v529 = vmul.f32 %v320, %v320
  %v530 = vsel %vm328, %v529, 0.0
  %531 = vadd.xlane.f32.xlu0 %v530
  %v532 = vpop.xlane.xlu0 %531
  %v534 = vsel %vm328, %v320, 0
  %v537 = vsel %vm328, %v525, 0
  %v540 = vsel %vm328, %v526, 0
  %v543 = vsel %vm328, %v527, 0
  %v546 = vsel %vm328, %v528, 0
  %548 = vmatprep.subr.mxu0 0.0
  %549 = vmatpush1.xpose.msra.mxu0 %v537
  %550 = vmatprep.subr.mxu0 0.0
  %551 = vmatpush1.xpose.msra.mxu0 %v540
  %552 = vmatprep.subr.mxu0 0.0
  %553 = vmatpush1.xpose.msra.mxu0 %v543
  %554 = vmatprep.subr.mxu0 0.0
  %555 = vmatpush1.xpose.msra.mxu0 %v546
  %556 = vmatprep.subr.mxu0 0.0
  %557 = vmatpush1.xpose.msra.mxu0 0.0
  %558 = vmatprep.subr.mxu0 0.0
  %559 = vmatpush1.xpose.msra.mxu0 0.0
  %560 = vmatprep.subr.mxu0 0.0
  %561 = vmatpush1.xpose.msra.mxu0 0.0
  %562 = vmatprep.subr.mxu0 0.0
  %563 = vmatpush1.xpose.msra.mxu0 0.0
  %564 = vmatprep.subr.mxu0 0.0
  %565 = vmatpush1.xpose.msra.mxu0 0.0
  %566 = vmatprep.subr.mxu0 0.0
  %567 = vmatpush1.xpose.msra.mxu0 0.0
  %568 = vmatprep.subr.mxu0 0.0
  %569 = vmatpush1.xpose.msra.mxu0 0.0
  %570 = vmatprep.subr.mxu0 0.0
  %571 = vmatpush1.xpose.msra.mxu0 0.0
  %572 = vmatprep.subr.mxu0 0.0
  %573 = vmatpush1.xpose.msra.mxu0 0.0
  %574 = vmatprep.subr.mxu0 0.0
  %575 = vmatpush1.xpose.msra.mxu0 0.0
  %576 = vmatprep.subr.mxu0 0.0
  %577 = vmatpush1.xpose.msra.mxu0 0.0
  %578 = vmatprep.subr.mxu0 0.0
  %579 = vmatpush1.xpose.msra.mxu0 0.0
  %580 = vmatprep.subr.mxu0 0.0
  %581 = vmatpush1.xpose.msra.mxu0 0.0
  %582 = vmatprep.subr.mxu0 0.0
  %583 = vmatpush1.xpose.msra.mxu0 0.0
  %584 = vmatprep.subr.mxu0 0.0
  %585 = vmatpush1.xpose.msra.mxu0 0.0
  %586 = vmatprep.subr.mxu0 0.0
  %587 = vmatpush1.xpose.msra.mxu0 0.0
  %588 = vmatprep.subr.mxu0 0.0
  %589 = vmatpush1.xpose.msra.mxu0 0.0
  %590 = vmatprep.subr.mxu0 0.0
  %591 = vmatpush1.xpose.msra.mxu0 0.0
  %592 = vmatprep.subr.mxu0 0.0
  %593 = vmatpush1.xpose.msra.mxu0 0.0
  %594 = vmatprep.subr.mxu0 0.0
  %595 = vmatpush1.xpose.msra.mxu0 0.0
  %596 = vmatprep.subr.mxu0 0.0
  %597 = vmatpush1.xpose.msra.mxu0 0.0
  %598 = vmatprep.subr.mxu0 0.0
  %599 = vmatpush1.xpose.msra.mxu0 0.0
  %600 = vmatprep.subr.mxu0 0.0
  %601 = vmatpush1.xpose.msra.mxu0 0.0
  %602 = vmatprep.subr.mxu0 0.0
  %603 = vmatpush1.xpose.msra.mxu0 0.0
  %604 = vmatprep.subr.mxu0 0.0
  %605 = vmatpush1.xpose.msra.mxu0 0.0
  %606 = vmatprep.subr.mxu0 0.0
  %607 = vmatpush1.xpose.msra.mxu0 0.0
  %608 = vmatprep.subr.mxu0 0.0
  %609 = vmatpush1.xpose.msra.mxu0 0.0
  %610 = vmatprep.subr.mxu0 0.0
  %611 = vmatpush1.xpose.msra.mxu0 0.0
  %612 = vmatprep.mubr.f32.mxu0 0.0
  %613 = vmatmul.mubr.f32.gmra.mrb[0].mxu0 %v534
  %v614 = vpop.f32.mrb[0].mxu0
  %v615 = vadd.f32 0.0, %v614
  %v616 = vpop.f32.mrb[0].mxu0
  %617 = vdwg.mxu0
  %v618 = vmul.f32 %v615, 2.0
  %v619 = vsub.f32 %v532, %v618
  %v620 = vld [vmem:[%s11] sm:$0x1]
  %v622 = vlaneseq
  %v623 = vshrl.u32 %v622, 7
  %v624 = vsub.s32 0, %v623
  %v625 = vrot.slane %v620, %v624
  %v627 = vadd.f32 %v619, %v625
  %v628 = vsel %vm83, %v627, inf
  %629 = vmin.xlane.f32.xlu0 %v628
  %v630 = vpop.xlane.xlu0 %629
  %vm631 = vcmp.le.f32.partialorder %v627, %v630
  %v632 = vsel %vm631, %v431, 32
  %v633 = vsel %vm83, %v632, 2147483647
  %v634 = vand.u32 %v633, 65535
  %v635 = vshra.s32 %v633, 16
  %v636 = vcvt.s32.f32 %v634
  %v637 = vcvt.s32.f32 %v635
  %638 = vmin.xlane.f32.xlu0 %v637
  %v639 = vpop.xlane.xlu0 %638
  %vm640 = vcmp.eq.f32.partialorder %v637, %v639
  %v641 = vsel %vm640, %v636, inf
  %642 = vmin.xlane.f32.xlu0 %v641
  %v643 = vpop.xlane.xlu0 %642
  %v644 = vcvt.f32.s32 %v643
  %v645 = vcvt.f32.s32 %v639
  %v646 = vshll.u32 %v645, 16
  %v647 = vadd.s32 %v646, %v644
  %vm648 = vcmp.eq.s32.totalorder %v431, %v647
  %v649 = vsel %vm648, 1, 0
  %v650 = vcvt.s32.f32 %v649
  %v652 = vsel %vm83, %v650, 0
  %654 = vmatprep.subr.mxu0 0.0
  %655 = vmatpush1.msra.mxu0 %v525
  %656 = vmatprep.subr.mxu0 0.0
  %657 = vmatpush1.msra.mxu0 %v526
  %658 = vmatprep.subr.mxu0 0.0
  %659 = vmatpush1.msra.mxu0 %v527
  %660 = vmatprep.subr.mxu0 0.0
  %661 = vmatpush1.msra.mxu0 %v528
  %662 = vmatprep.subr.mxu0 0.0
  %663 = vmatpush1.msra.mxu0 0.0
  %664 = vmatprep.subr.mxu0 0.0
  %665 = vmatpush1.msra.mxu0 0.0
  %666 = vmatprep.subr.mxu0 0.0
  %667 = vmatpush1.msra.mxu0 0.0
  %668 = vmatprep.subr.mxu0 0.0
  %669 = vmatpush1.msra.mxu0 0.0
  %670 = vmatprep.subr.mxu0 0.0
  %671 = vmatpush1.msra.mxu0 0.0
  %672 = vmatprep.subr.mxu0 0.0
  %673 = vmatpush1.msra.mxu0 0.0
  %674 = vmatprep.subr.mxu0 0.0
  %675 = vmatpush1.msra.mxu0 0.0
  %676 = vmatprep.subr.mxu0 0.0
  %677 = vmatpush1.msra.mxu0 0.0
  %678 = vmatprep.subr.mxu0 0.0
  %679 = vmatpush1.msra.mxu0 0.0
  %680 = vmatprep.subr.mxu0 0.0
  %681 = vmatpush1.msra.mxu0 0.0
  %682 = vmatprep.subr.mxu0 0.0
  %683 = vmatpush1.msra.mxu0 0.0
  %684 = vmatprep.subr.mxu0 0.0
  %685 = vmatpush1.msra.mxu0 0.0
  %686 = vmatprep.subr.mxu0 0.0
  %687 = vmatpush1.msra.mxu0 0.0
  %688 = vmatprep.subr.mxu0 0.0
  %689 = vmatpush1.msra.mxu0 0.0
  %690 = vmatprep.subr.mxu0 0.0
  %691 = vmatpush1.msra.mxu0 0.0
  %692 = vmatprep.subr.mxu0 0.0
  %693 = vmatpush1.msra.mxu0 0.0
  %694 = vmatprep.subr.mxu0 0.0
  %695 = vmatpush1.msra.mxu0 0.0
  %696 = vmatprep.subr.mxu0 0.0
  %697 = vmatpush1.msra.mxu0 0.0
  %698 = vmatprep.subr.mxu0 0.0
  %699 = vmatpush1.msra.mxu0 0.0
  %700 = vmatprep.subr.mxu0 0.0
  %701 = vmatpush1.msra.mxu0 0.0
  %702 = vmatprep.subr.mxu0 0.0
  %703 = vmatpush1.msra.mxu0 0.0
  %704 = vmatprep.subr.mxu0 0.0
  %705 = vmatpush1.msra.mxu0 0.0
  %706 = vmatprep.subr.mxu0 0.0
  %707 = vmatpush1.msra.mxu0 0.0
  %708 = vmatprep.subr.mxu0 0.0
  %709 = vmatpush1.msra.mxu0 0.0
  %710 = vmatprep.subr.mxu0 0.0
  %711 = vmatpush1.msra.mxu0 0.0
  %712 = vmatprep.subr.mxu0 0.0
  %713 = vmatpush1.msra.mxu0 0.0
  %714 = vmatprep.subr.mxu0 0.0
  %715 = vmatpush1.msra.mxu0 0.0
  %716 = vmatprep.subr.mxu0 0.0
  %717 = vmatpush1.msra.mxu0 0.0
  %718 = vmatprep.mubr.f32.mxu0 0.0
  %719 = vmatmul.mubr.f32.gmra.mrb[0].mxu0 %v652
  %v720 = vpop.f32.mrb[0].mxu0
  %v721 = vadd.f32 0.0, %v720
  %v722 = vpop.f32.mrb[0].mxu0
  %723 = vdwg.mxu0
  %v724 = vld [vmem:[%s12] sm:$0xff]
  %v725 = vld [vmem:[%s12 + $0x8] sm:$0xff]
  %v726 = vld [vmem:[%s13] sm:$0xff]
  %v727 = vld [vmem:[%s13 + $0x8] sm:$0xff]
  %v729 = vsel %vm328, %v522, 0
  %731 = vmatprep.subr.mxu0 0.0
  %732 = vmatpush1.msra.mxu0 %v726
  %733 = vmatprep.subr.mxu0 0.0
  %734 = vmatpush1.msra.mxu0 %v727
  %735 = vmatprep.subr.mxu0 0.0
  %736 = vmatpush1.msra.mxu0 0.0
  %737 = vmatprep.subr.mxu0 0.0
  %738 = vmatpush1.msra.mxu0 0.0
  %739 = vmatprep.subr.mxu0 0.0
  %740 = vmatpush1.msra.mxu0 0.0
  %741 = vmatprep.subr.mxu0 0.0
  %742 = vmatpush1.msra.mxu0 0.0
  %743 = vmatprep.subr.mxu0 0.0
  %744 = vmatpush1.msra.mxu0 0.0
  %745 = vmatprep.subr.mxu0 0.0
  %746 = vmatpush1.msra.mxu0 0.0
  %747 = vmatprep.subr.mxu0 0.0
  %748 = vmatpush1.msra.mxu0 0.0
  %749 = vmatprep.subr.mxu0 0.0
  %750 = vmatpush1.msra.mxu0 0.0
  %751 = vmatprep.subr.mxu0 0.0
  %752 = vmatpush1.msra.mxu0 0.0
  %753 = vmatprep.subr.mxu0 0.0
  %754 = vmatpush1.msra.mxu0 0.0
  %755 = vmatprep.subr.mxu0 0.0
  %756 = vmatpush1.msra.mxu0 0.0
  %757 = vmatprep.subr.mxu0 0.0
  %758 = vmatpush1.msra.mxu0 0.0
  %759 = vmatprep.subr.mxu0 0.0
  %760 = vmatpush1.msra.mxu0 0.0
  %761 = vmatprep.subr.mxu0 0.0
  %762 = vmatpush1.msra.mxu0 0.0
  %763 = vmatprep.subr.mxu0 0.0
  %764 = vmatpush1.msra.mxu0 0.0
  %765 = vmatprep.subr.mxu0 0.0
  %766 = vmatpush1.msra.mxu0 0.0
  %767 = vmatprep.subr.mxu0 0.0
  %768 = vmatpush1.msra.mxu0 0.0
  %769 = vmatprep.subr.mxu0 0.0
  %770 = vmatpush1.msra.mxu0 0.0
  %771 = vmatprep.subr.mxu0 0.0
  %772 = vmatpush1.msra.mxu0 0.0
  %773 = vmatprep.subr.mxu0 0.0
  %774 = vmatpush1.msra.mxu0 0.0
  %775 = vmatprep.subr.mxu0 0.0
  %776 = vmatpush1.msra.mxu0 0.0
  %777 = vmatprep.subr.mxu0 0.0
  %778 = vmatpush1.msra.mxu0 0.0
  %779 = vmatprep.subr.mxu0 0.0
  %780 = vmatpush1.msra.mxu0 0.0
  %781 = vmatprep.subr.mxu0 0.0
  %782 = vmatpush1.msra.mxu0 0.0
  %783 = vmatprep.subr.mxu0 0.0
  %784 = vmatpush1.msra.mxu0 0.0
  %785 = vmatprep.subr.mxu0 0.0
  %786 = vmatpush1.msra.mxu0 0.0
  %787 = vmatprep.subr.mxu0 0.0
  %788 = vmatpush1.msra.mxu0 0.0
  %789 = vmatprep.subr.mxu0 0.0
  %790 = vmatpush1.msra.mxu0 0.0
  %791 = vmatprep.subr.mxu0 0.0
  %792 = vmatpush1.msra.mxu0 0.0
  %793 = vmatprep.subr.mxu0 0.0
  %794 = vmatpush1.msra.mxu0 0.0
  %795 = vmatprep.mubr.f32.mxu0 0.0
  %796 = vmatmul.mubr.f32.gmra.mrb[0].mxu0 %v729
  %v797 = vpop.f32.mrb[0].mxu0
  %v798 = vadd.f32 0.0, %v797
  %v799 = vpop.f32.mrb[0].mxu0
  %800 = vdwg.mxu0
  %801 = vmatprep.subr.mxu0 0.0
  %802 = vmatpush1.msra.mxu0 %v724
  %803 = vmatprep.subr.mxu0 0.0
  %804 = vmatpush1.msra.mxu0 %v725
  %805 = vmatprep.subr.mxu0 0.0
  %806 = vmatpush1.msra.mxu0 0.0
  %807 = vmatprep.subr.mxu0 0.0
  %808 = vmatpush1.msra.mxu0 0.0
  %809 = vmatprep.subr.mxu0 0.0
  %810 = vmatpush1.msra.mxu0 0.0
  %811 = vmatprep.subr.mxu0 0.0
  %812 = vmatpush1.msra.mxu0 0.0
  %813 = vmatprep.subr.mxu0 0.0
  %814 = vmatpush1.msra.mxu0 0.0
  %815 = vmatprep.subr.mxu0 0.0
  %816 = vmatpush1.msra.mxu0 0.0
  %817 = vmatprep.subr.mxu0 0.0
  %818 = vmatpush1.msra.mxu0 0.0
  %819 = vmatprep.subr.mxu0 0.0
  %820 = vmatpush1.msra.mxu0 0.0
  %821 = vmatprep.subr.mxu0 0.0
  %822 = vmatpush1.msra.mxu0 0.0
  %823 = vmatprep.subr.mxu0 0.0
  %824 = vmatpush1.msra.mxu0 0.0
  %825 = vmatprep.subr.mxu0 0.0
  %826 = vmatpush1.msra.mxu0 0.0
  %827 = vmatprep.subr.mxu0 0.0
  %828 = vmatpush1.msra.mxu0 0.0
  %829 = vmatprep.subr.mxu0 0.0
  %830 = vmatpush1.msra.mxu0 0.0
  %831 = vmatprep.subr.mxu0 0.0
  %832 = vmatpush1.msra.mxu0 0.0
  %833 = vmatprep.subr.mxu0 0.0
  %834 = vmatpush1.msra.mxu0 0.0
  %835 = vmatprep.subr.mxu0 0.0
  %836 = vmatpush1.msra.mxu0 0.0
  %837 = vmatprep.subr.mxu0 0.0
  %838 = vmatpush1.msra.mxu0 0.0
  %839 = vmatprep.subr.mxu0 0.0
  %840 = vmatpush1.msra.mxu0 0.0
  %841 = vmatprep.subr.mxu0 0.0
  %842 = vmatpush1.msra.mxu0 0.0
  %843 = vmatprep.subr.mxu0 0.0
  %844 = vmatpush1.msra.mxu0 0.0
  %845 = vmatprep.subr.mxu0 0.0
  %846 = vmatpush1.msra.mxu0 0.0
  %847 = vmatprep.subr.mxu0 0.0
  %848 = vmatpush1.msra.mxu0 0.0
  %849 = vmatprep.subr.mxu0 0.0
  %850 = vmatpush1.msra.mxu0 0.0
  %851 = vmatprep.subr.mxu0 0.0
  %852 = vmatpush1.msra.mxu0 0.0
  %853 = vmatprep.subr.mxu0 0.0
  %854 = vmatpush1.msra.mxu0 0.0
  %855 = vmatprep.subr.mxu0 0.0
  %856 = vmatpush1.msra.mxu0 0.0
  %857 = vmatprep.subr.mxu0 0.0
  %858 = vmatpush1.msra.mxu0 0.0
  %859 = vmatprep.subr.mxu0 0.0
  %860 = vmatpush1.msra.mxu0 0.0
  %861 = vmatprep.subr.mxu0 0.0
  %862 = vmatpush1.msra.mxu0 0.0
  %863 = vmatprep.subr.mxu0 0.0
  %864 = vmatpush1.msra.mxu0 0.0
  %865 = vmatprep.mubr.f32.mxu0 0.0
  %866 = vmatmul.mubr.f32.gmra.mrb[0].mxu0 %v333
  %v867 = vpop.f32.mrb[0].mxu0
  %v868 = vadd.f32 %v798, %v867
  %v869 = vpop.f32.mrb[0].mxu0
  %870 = vdwg.mxu0
  %v871 = vld [vmem:[%s14] sm:$0x1]
  %v873 = vlaneseq
  %v874 = vshrl.u32 %v873, 7
  %v875 = vsub.s32 0, %v874
  %v876 = vrot.slane %v871, %v875
  %v878 = vadd.f32 %v868, %v876
  %v879 = vmax.f32 %v878, 0.0
  %v880 = vld [vmem:[%s15] sm:$0xff]
  %v881 = vld [vmem:[%s15 + $0x8] sm:$0xff]
  %v882 = vld [vmem:[%s15 + $0x10] sm:$0xff]
  %v883 = vld [vmem:[%s15 + $0x18] sm:$0xff]
  %v884 = vld [vmem:[%s16] sm:$0x1]
  %v886 = vlaneseq
  %v887 = vshrl.u32 %v886, 7
  %v888 = vsub.s32 0, %v887
  %v889 = vrot.slane %v884, %v888
  %v892 = vsel %vm83, %v879, 0
  %894 = vmatprep.subr.mxu0 0.0
  %895 = vmatpush1.msra.mxu0 %v880
  %896 = vmatprep.subr.mxu0 0.0
  %897 = vmatpush1.msra.mxu0 %v881
  %898 = vmatprep.subr.mxu0 0.0
  %899 = vmatpush1.msra.mxu0 %v882
  %900 = vmatprep.subr.mxu0 0.0
  %901 = vmatpush1.msra.mxu0 %v883
  %902 = vmatprep.subr.mxu0 0.0
  %903 = vmatpush1.msra.mxu0 0.0
  %904 = vmatprep.subr.mxu0 0.0
  %905 = vmatpush1.msra.mxu0 0.0
  %906 = vmatprep.subr.mxu0 0.0
  %907 = vmatpush1.msra.mxu0 0.0
  %908 = vmatprep.subr.mxu0 0.0
  %909 = vmatpush1.msra.mxu0 0.0
  %910 = vmatprep.subr.mxu0 0.0
  %911 = vmatpush1.msra.mxu0 0.0
  %912 = vmatprep.subr.mxu0 0.0
  %913 = vmatpush1.msra.mxu0 0.0
  %914 = vmatprep.subr.mxu0 0.0
  %915 = vmatpush1.msra.mxu0 0.0
  %916 = vmatprep.subr.mxu0 0.0
  %917 = vmatpush1.msra.mxu0 0.0
  %918 = vmatprep.subr.mxu0 0.0
  %919 = vmatpush1.msra.mxu0 0.0
  %920 = vmatprep.subr.mxu0 0.0
  %921 = vmatpush1.msra.mxu0 0.0
  %922 = vmatprep.subr.mxu0 0.0
  %923 = vmatpush1.msra.mxu0 0.0
  %924 = vmatprep.subr.mxu0 0.0
  %925 = vmatpush1.msra.mxu0 0.0
  %926 = vmatprep.subr.mxu0 0.0
  %927 = vmatpush1.msra.mxu0 0.0
  %928 = vmatprep.subr.mxu0 0.0
  %929 = vmatpush1.msra.mxu0 0.0
  %930 = vmatprep.subr.mxu0 0.0
  %931 = vmatpush1.msra.mxu0 0.0
  %932 = vmatprep.subr.mxu0 0.0
  %933 = vmatpush1.msra.mxu0 0.0
  %934 = vmatprep.subr.mxu0 0.0
  %935 = vmatpush1.msra.mxu0 0.0
  %936 = vmatprep.subr.mxu0 0.0
  %937 = vmatpush1.msra.mxu0 0.0
  %938 = vmatprep.subr.mxu0 0.0
  %939 = vmatpush1.msra.mxu0 0.0
  %940 = vmatprep.subr.mxu0 0.0
  %941 = vmatpush1.msra.mxu0 0.0
  %942 = vmatprep.subr.mxu0 0.0
  %943 = vmatpush1.msra.mxu0 0.0
  %944 = vmatprep.subr.mxu0 0.0
  %945 = vmatpush1.msra.mxu0 0.0
  %946 = vmatprep.subr.mxu0 0.0
  %947 = vmatpush1.msra.mxu0 0.0
  %948 = vmatprep.subr.mxu0 0.0
  %949 = vmatpush1.msra.mxu0 0.0
  %950 = vmatprep.subr.mxu0 0.0
  %951 = vmatpush1.msra.mxu0 0.0
  %952 = vmatprep.subr.mxu0 0.0
  %953 = vmatpush1.msra.mxu0 0.0
  %954 = vmatprep.subr.mxu0 0.0
  %955 = vmatpush1.msra.mxu0 0.0
  %956 = vmatprep.subr.mxu0 0.0
  %957 = vmatpush1.msra.mxu0 0.0
  %958 = vmatprep.mubr.f32.mxu0 0.0
  %959 = vmatmul.mubr.f32.gmra.mrb[0].mxu0 %v892
  %v960 = vpop.f32.mrb[0].mxu0
  %v961 = vadd.f32 %v889, %v960
  %v962 = vpop.f32.mrb[0].mxu0
  %963 = vdwg.mxu0
  %v964 = vmax.f32 %v961, -10.0
  %v965 = vmin.f32 %v964, 10.0
  %v966 = vld [vmem:[%s17] sm:$0xff]
  %v967 = vld [vmem:[%s17 + $0x8] sm:$0xff]
  %v968 = vld [vmem:[%s18] sm:$0xff]
  %v969 = vld [vmem:[%s18 + $0x8] sm:$0xff]
  %970 = vmatprep.subr.mxu0 0.0
  %971 = vmatpush1.msra.mxu0 %v968
  %972 = vmatprep.subr.mxu0 0.0
  %973 = vmatpush1.msra.mxu0 %v969
  %974 = vmatprep.subr.mxu0 0.0
  %975 = vmatpush1.msra.mxu0 0.0
  %976 = vmatprep.subr.mxu0 0.0
  %977 = vmatpush1.msra.mxu0 0.0
  %978 = vmatprep.subr.mxu0 0.0
  %979 = vmatpush1.msra.mxu0 0.0
  %980 = vmatprep.subr.mxu0 0.0
  %981 = vmatpush1.msra.mxu0 0.0
  %982 = vmatprep.subr.mxu0 0.0
  %983 = vmatpush1.msra.mxu0 0.0
  %984 = vmatprep.subr.mxu0 0.0
  %985 = vmatpush1.msra.mxu0 0.0
  %986 = vmatprep.subr.mxu0 0.0
  %987 = vmatpush1.msra.mxu0 0.0
  %988 = vmatprep.subr.mxu0 0.0
  %989 = vmatpush1.msra.mxu0 0.0
  %990 = vmatprep.subr.mxu0 0.0
  %991 = vmatpush1.msra.mxu0 0.0
  %992 = vmatprep.subr.mxu0 0.0
  %993 = vmatpush1.msra.mxu0 0.0
  %994 = vmatprep.subr.mxu0 0.0
  %995 = vmatpush1.msra.mxu0 0.0
  %996 = vmatprep.subr.mxu0 0.0
  %997 = vmatpush1.msra.mxu0 0.0
  %998 = vmatprep.subr.mxu0 0.0
  %999 = vmatpush1.msra.mxu0 0.0
  %1000 = vmatprep.subr.mxu0 0.0
  %1001 = vmatpush1.msra.mxu0 0.0
  %1002 = vmatprep.subr.mxu0 0.0
  %1003 = vmatpush1.msra.mxu0 0.0
  %1004 = vmatprep.subr.mxu0 0.0
  %1005 = vmatpush1.msra.mxu0 0.0
  %1006 = vmatprep.subr.mxu0 0.0
  %1007 = vmatpush1.msra.mxu0 0.0
  %1008 = vmatprep.subr.mxu0 0.0
  %1009 = vmatpush1.msra.mxu0 0.0
  %1010 = vmatprep.subr.mxu0 0.0
  %1011 = vmatpush1.msra.mxu0 0.0
  %1012 = vmatprep.subr.mxu0 0.0
  %1013 = vmatpush1.msra.mxu0 0.0
  %1014 = vmatprep.subr.mxu0 0.0
  %1015 = vmatpush1.msra.mxu0 0.0
  %1016 = vmatprep.subr.mxu0 0.0
  %1017 = vmatpush1.msra.mxu0 0.0
  %1018 = vmatprep.subr.mxu0 0.0
  %1019 = vmatpush1.msra.mxu0 0.0
  %1020 = vmatprep.subr.mxu0 0.0
  %1021 = vmatpush1.msra.mxu0 0.0
  %1022 = vmatprep.subr.mxu0 0.0
  %1023 = vmatpush1.msra.mxu0 0.0
  %1024 = vmatprep.subr.mxu0 0.0
  %1025 = vmatpush1.msra.mxu0 0.0
  %1026 = vmatprep.subr.mxu0 0.0
  %1027 = vmatpush1.msra.mxu0 0.0
  %1028 = vmatprep.subr.mxu0 0.0
  %1029 = vmatpush1.msra.mxu0 0.0
  %1030 = vmatprep.subr.mxu0 0.0
  %1031 = vmatpush1.msra.mxu0 0.0
  %1032 = vmatprep.subr.mxu0 0.0
  %1033 = vmatpush1.msra.mxu0 0.0
  %1034 = vmatprep.mubr.f32.mxu0 0.0
  %1035 = vmatmul.mubr.f32.gmra.mrb[0].mxu0 %v729
  %v1036 = vpop.f32.mrb[0].mxu0
  %v1037 = vadd.f32 0.0, %v1036
  %v1038 = vpop.f32.mrb[0].mxu0
  %1039 = vdwg.mxu0
  %1040 = vmatprep.subr.mxu0 0.0
  %1041 = vmatpush1.msra.mxu0 %v966
  %1042 = vmatprep.subr.mxu0 0.0
  %1043 = vmatpush1.msra.mxu0 %v967
  %1044 = vmatprep.subr.mxu0 0.0
  %1045 = vmatpush1.msra.mxu0 0.0
  %1046 = vmatprep.subr.mxu0 0.0
  %1047 = vmatpush1.msra.mxu0 0.0
  %1048 = vmatprep.subr.mxu0 0.0
  %1049 = vmatpush1.msra.mxu0 0.0
  %1050 = vmatprep.subr.mxu0 0.0
  %1051 = vmatpush1.msra.mxu0 0.0
  %1052 = vmatprep.subr.mxu0 0.0
  %1053 = vmatpush1.msra.mxu0 0.0
  %1054 = vmatprep.subr.mxu0 0.0
  %1055 = vmatpush1.msra.mxu0 0.0
  %1056 = vmatprep.subr.mxu0 0.0
  %1057 = vmatpush1.msra.mxu0 0.0
  %1058 = vmatprep.subr.mxu0 0.0
  %1059 = vmatpush1.msra.mxu0 0.0
  %1060 = vmatprep.subr.mxu0 0.0
  %1061 = vmatpush1.msra.mxu0 0.0
  %1062 = vmatprep.subr.mxu0 0.0
  %1063 = vmatpush1.msra.mxu0 0.0
  %1064 = vmatprep.subr.mxu0 0.0
  %1065 = vmatpush1.msra.mxu0 0.0
  %1066 = vmatprep.subr.mxu0 0.0
  %1067 = vmatpush1.msra.mxu0 0.0
  %1068 = vmatprep.subr.mxu0 0.0
  %1069 = vmatpush1.msra.mxu0 0.0
  %1070 = vmatprep.subr.mxu0 0.0
  %1071 = vmatpush1.msra.mxu0 0.0
  %1072 = vmatprep.subr.mxu0 0.0
  %1073 = vmatpush1.msra.mxu0 0.0
  %1074 = vmatprep.subr.mxu0 0.0
  %1075 = vmatpush1.msra.mxu0 0.0
  %1076 = vmatprep.subr.mxu0 0.0
  %1077 = vmatpush1.msra.mxu0 0.0
  %1078 = vmatprep.subr.mxu0 0.0
  %1079 = vmatpush1.msra.mxu0 0.0
  %1080 = vmatprep.subr.mxu0 0.0
  %1081 = vmatpush1.msra.mxu0 0.0
  %1082 = vmatprep.subr.mxu0 0.0
  %1083 = vmatpush1.msra.mxu0 0.0
  %1084 = vmatprep.subr.mxu0 0.0
  %1085 = vmatpush1.msra.mxu0 0.0
  %1086 = vmatprep.subr.mxu0 0.0
  %1087 = vmatpush1.msra.mxu0 0.0
  %1088 = vmatprep.subr.mxu0 0.0
  %1089 = vmatpush1.msra.mxu0 0.0
  %1090 = vmatprep.subr.mxu0 0.0
  %1091 = vmatpush1.msra.mxu0 0.0
  %1092 = vmatprep.subr.mxu0 0.0
  %1093 = vmatpush1.msra.mxu0 0.0
  %1094 = vmatprep.subr.mxu0 0.0
  %1095 = vmatpush1.msra.mxu0 0.0
  %1096 = vmatprep.subr.mxu0 0.0
  %1097 = vmatpush1.msra.mxu0 0.0
  %1098 = vmatprep.subr.mxu0 0.0
  %1099 = vmatpush1.msra.mxu0 0.0
  %1100 = vmatprep.subr.mxu0 0.0
  %1101 = vmatpush1.msra.mxu0 0.0
  %1102 = vmatprep.subr.mxu0 0.0
  %1103 = vmatpush1.msra.mxu0 0.0
  %1104 = vmatprep.mubr.f32.mxu0 0.0
  %1105 = vmatmul.mubr.f32.gmra.mrb[0].mxu0 %v333
  %v1106 = vpop.f32.mrb[0].mxu0
  %v1107 = vadd.f32 %v1037, %v1106
  %v1108 = vpop.f32.mrb[0].mxu0
  %1109 = vdwg.mxu0
  %v1110 = vld [vmem:[%s19] sm:$0x1]
  %v1112 = vlaneseq
  %v1113 = vshrl.u32 %v1112, 7
  %v1114 = vsub.s32 0, %v1113
  %v1115 = vrot.slane %v1110, %v1114
  %v1117 = vadd.f32 %v1107, %v1115
  %v1118 = vmax.f32 %v1117, 0.0
  %v1119 = vld [vmem:[%s20] sm:$0xff]
  %v1120 = vld [vmem:[%s20 + $0x8] sm:$0xff]
  %v1121 = vld [vmem:[%s20 + $0x10] sm:$0xff]
  %v1122 = vld [vmem:[%s20 + $0x18] sm:$0xff]
  %v1123 = vld [vmem:[%s21] sm:$0x1]
  %v1125 = vlaneseq
  %v1126 = vshrl.u32 %v1125, 7
  %v1127 = vsub.s32 0, %v1126
  %v1128 = vrot.slane %v1123, %v1127
  %v1131 = vsel %vm83, %v1118, 0
  %1133 = vmatprep.subr.mxu0 0.0
  %1134 = vmatpush1.msra.mxu0 %v1119
  %1135 = vmatprep.subr.mxu0 0.0
  %1136 = vmatpush1.msra.mxu0 %v1120
  %1137 = vmatprep.subr.mxu0 0.0
  %1138 = vmatpush1.msra.mxu0 %v1121
  %1139 = vmatprep.subr.mxu0 0.0
  %1140 = vmatpush1.msra.mxu0 %v1122
  %1141 = vmatprep.subr.mxu0 0.0
  %1142 = vmatpush1.msra.mxu0 0.0
  %1143 = vmatprep.subr.mxu0 0.0
  %1144 = vmatpush1.msra.mxu0 0.0
  %1145 = vmatprep.subr.mxu0 0.0
  %1146 = vmatpush1.msra.mxu0 0.0
  %1147 = vmatprep.subr.mxu0 0.0
  %1148 = vmatpush1.msra.mxu0 0.0
  %1149 = vmatprep.subr.mxu0 0.0
  %1150 = vmatpush1.msra.mxu0 0.0
  %1151 = vmatprep.subr.mxu0 0.0
  %1152 = vmatpush1.msra.mxu0 0.0
  %1153 = vmatprep.subr.mxu0 0.0
  %1154 = vmatpush1.msra.mxu0 0.0
  %1155 = vmatprep.subr.mxu0 0.0
  %1156 = vmatpush1.msra.mxu0 0.0
  %1157 = vmatprep.subr.mxu0 0.0
  %1158 = vmatpush1.msra.mxu0 0.0
  %1159 = vmatprep.subr.mxu0 0.0
  %1160 = vmatpush1.msra.mxu0 0.0
  %1161 = vmatprep.subr.mxu0 0.0
  %1162 = vmatpush1.msra.mxu0 0.0
  %1163 = vmatprep.subr.mxu0 0.0
  %1164 = vmatpush1.msra.mxu0 0.0
  %1165 = vmatprep.subr.mxu0 0.0
  %1166 = vmatpush1.msra.mxu0 0.0
  %1167 = vmatprep.subr.mxu0 0.0
  %1168 = vmatpush1.msra.mxu0 0.0
  %1169 = vmatprep.subr.mxu0 0.0
  %1170 = vmatpush1.msra.mxu0 0.0
  %1171 = vmatprep.subr.mxu0 0.0
  %1172 = vmatpush1.msra.mxu0 0.0
  %1173 = vmatprep.subr.mxu0 0.0
  %1174 = vmatpush1.msra.mxu0 0.0
  %1175 = vmatprep.subr.mxu0 0.0
  %1176 = vmatpush1.msra.mxu0 0.0
  %1177 = vmatprep.subr.mxu0 0.0
  %1178 = vmatpush1.msra.mxu0 0.0
  %1179 = vmatprep.subr.mxu0 0.0
  %1180 = vmatpush1.msra.mxu0 0.0
  %1181 = vmatprep.subr.mxu0 0.0
  %1182 = vmatpush1.msra.mxu0 0.0
  %1183 = vmatprep.subr.mxu0 0.0
  %1184 = vmatpush1.msra.mxu0 0.0
  %1185 = vmatprep.subr.mxu0 0.0
  %1186 = vmatpush1.msra.mxu0 0.0
  %1187 = vmatprep.subr.mxu0 0.0
  %1188 = vmatpush1.msra.mxu0 0.0
  %1189 = vmatprep.subr.mxu0 0.0
  %1190 = vmatpush1.msra.mxu0 0.0
  %1191 = vmatprep.subr.mxu0 0.0
  %1192 = vmatpush1.msra.mxu0 0.0
  %1193 = vmatprep.subr.mxu0 0.0
  %1194 = vmatpush1.msra.mxu0 0.0
  %1195 = vmatprep.subr.mxu0 0.0
  %1196 = vmatpush1.msra.mxu0 0.0
  %1197 = vmatprep.mubr.f32.mxu0 0.0
  %1198 = vmatmul.mubr.f32.gmra.mrb[0].mxu0 %v1131
  %v1199 = vpop.f32.mrb[0].mxu0
  %v1200 = vadd.f32 %v1128, %v1199
  %v1201 = vpop.f32.mrb[0].mxu0
  %1202 = vdwg.mxu0
  %v1203 = vmul.f32 %v1200, 0.5
  %v1204 = vmul.f32 %v1203, 1.442695
  %v1205 = vpow.pop %v1204
  %v1206 = vld [vmem:[%s1] sm:$0xff]
  %v1207 = vmul.f32 %v1205, %v1206
  %v1208 = vadd.f32 %v965, %v1207
  %1210 = vrot.lane.b32.xlu0 %v721, 16
  %v1211 = vpop.permute.xlu0 %1210
  %1213 = vrot.lane.b32.xlu0 %v451, 32
  %v1214 = vpop.permute.xlu0 %1213
  %1216 = vrot.lane.b32.xlu0 %v650, 64
  %v1217 = vpop.permute.xlu0 %1216
  %1220 = vrot.lane.b32.xlu0 %v1208, 96
  %v1221 = vpop.permute.xlu0 %1220
  %v1223 = vsel %vm328, %v522, %v1211
  %v1224 = vsel %vm83, %v1223, %v1214
  %vm1225 = vcmask 523264
  %v1226 = vsel %vm1225, %v1224, %v1217
  %vm1227 = vcmask 785408
  %v1228 = vsel %vm1227, %v1226, %v1221
  %vm1229 = vcmask 916480
  %v1230 = vsel %vm1229, %v1228, 0.0
  %1231 = vst [vmem:[%s22] sm:$0xff] %v1230
  // Predicated region
  $region90: #{causal_model_forward.1} parent=0 // pred_check
    _
  $region91: #{causal_model_forward.1} parent=0 // pred_check_branch
    %1233 = sbr.rel (0) target = $region93
  $region92: #{causal_model_forward.1} parent=0 // pred_region
    _
  $region93: #{causal_model_forward.1} parent=0 // pred_fallthru
    _
  // Predicated region
  $region94: #{causal_model_forward.1} parent=0 // pred_check
    _
  $region95: #{causal_model_forward.1} parent=0 // pred_check_branch
    %1235 = sbr.rel (0) target = $region97
  $region96: #{causal_model_forward.1} parent=0 // pred_region
    _
  $region97: #{causal_model_forward.1} parent=0 // pred_fallthru
    _

</llo_original>
